<compile_context>
chip_gen: v7x
topology: tpu7x:2x2x1
jax: 0.10.0
libtpu: 0.0.40
codegen_flags: <defaults>
</compile_context>

<pallas_src>
import math
from functools import partial

import numpy as np
import jax
import jax.numpy as jnp
from jax.experimental import pallas as pl
from jax.experimental.pallas import tpu as pltpu


def _round_up(x, m):
    return ((x + m - 1) // m) * m


# ----------------------------------------------------------------------------
# Fused Pallas kernel: embedding gather + all GCN layers + span pooling +
# classifier, one launch, everything resident in VMEM.
# ----------------------------------------------------------------------------

def _fused_relnet_kernel(wg_ref, emb_ref, w_ref, b_ref, sel_ref, cw_ref, cb_ref,
                         out_ref, h_scr, *, num_layers, batch, seq, b_pad,
                         adj_c, mxu_dtype):
    """Layout:
    wg_ref  : (B*N,)      int32 word_graph indices in SMEM
    emb_ref : (V, 2H)     base-encoder stand-in embedding table (f32, VMEM)
    w_ref   : (L, 2H, 2H) per-layer [W_fw | W_bw]  (mxu_dtype at rest)
    b_ref   : (L, 1, 2H)  per-layer [b_fw | b_bw]  (f32)
    sel_ref : (2*B_pad, B*N) stacked span mean-pooling matrix (f32)
    cw_ref  : (4H, C_pad) classifier weight, lane-padded (mxu_dtype at rest)
    cb_ref  : (1,  C_pad) classifier bias (f32)
    out_ref : (B_pad, C_pad) lane/sublane-dense logits slab
    h_scr   : (B*N, 2H)   VMEM scratch holding the activations
    """
    bn, d = h_scr.shape                       # bn == B*N, d == 2H

    # ---- fused base-embedding gather (indices live in SMEM) -----------------
    for i in range(bn):                       # static unroll; B*N is tiny
        idx = wg_ref[i]
        h_scr[pl.ds(i, 1), :] = emb_ref[pl.ds(idx, 1), :]
    h = h_scr[...]                            # (B*N, 2H) f32

    # ---- GCN layers (fw/bw fused on the lane axis) ---------------------------
    for l in range(num_layers):               # static unroll (L is tiny)
        w = w_ref[l]                          # (2H, 2H) == [W_fw | W_bw], mxu_dtype
        xw = jnp.dot(h.astype(mxu_dtype), w,
                     preferred_element_type=jnp.float32) + b_ref[l]      # f32
        # parser_equal_probs branch: dep_fw == dep_bw == adj_c*ones(N,N) + I, hence
        #   adj @ X == adj_c * colsum(X) + X   (per example)
        # TODO(synk): a learned parser energy needs the general per-direction
        #             (N,N) @ (N,H) matmul path here instead of this shortcut.
        xw3 = xw.reshape(batch, seq, d)
        agg = xw3 + adj_c * jnp.sum(xw3, axis=1, keepdims=True)
        # ReLU; the result is already torch.cat([out_fw, out_bw], dim=2).
        h = jnp.maximum(agg, 0.0).reshape(bn, d)

    # ---- span mean pooling: ONE matmul with the stacked selector -------------
    p = jnp.dot(sel_ref[...], h, preferred_element_type=jnp.float32)  # (2*B_pad, 2H)
    p1 = p[0:b_pad, :]                        # first-entity means  (static slice)
    p2 = p[b_pad:2 * b_pad, :]                # second-entity means (static slice)

    # ---- classifier on concat([p1, p2], -1) without materializing the concat:
    #        feats @ W = p1 @ W[:2H] + p2 @ W[2H:]
    logits = (jnp.dot(p1.astype(mxu_dtype), cw_ref[0:d, :],
                      preferred_element_type=jnp.float32)
              + jnp.dot(p2.astype(mxu_dtype), cw_ref[d:2 * d, :],
                        preferred_element_type=jnp.float32)
              + cb_ref[...])
    out_ref[...] = logits                     # (B_pad, C_pad) unmasked store


# ----------------------------------------------------------------------------
# Host-side packing (done ONCE in build_relnet_forward, not per call)
# ----------------------------------------------------------------------------

def init_params(key, *, hid_size, gcn_layer, vocab, num_classes):
    H = hid_size
    D = 2 * hid_size
    stdv = 1.0 / math.sqrt(H)
    keys = jax.random.split(key, 4 * gcn_layer + 3)
    params = {"W_fw": [], "b_fw": [], "W_bw": [], "b_bw": []}
    k = 0
    for _ in range(gcn_layer):
        params["W_fw"].append(jax.random.uniform(keys[k], (D, H), jnp.float32, -stdv, stdv)); k += 1
        params["b_fw"].append(jax.random.uniform(keys[k], (1, H), jnp.float32, -stdv, stdv)); k += 1
        params["W_bw"].append(jax.random.uniform(keys[k], (D, H), jnp.float32, -stdv, stdv)); k += 1
        params["b_bw"].append(jax.random.uniform(keys[k], (1, H), jnp.float32, -stdv, stdv)); k += 1
    # TODO(synk): base_encoder is an external module (BiLSTM/BERT); deterministic
    # embedding-table stand-in producing word_h of shape (B, N, 2H).
    params["base_emb"] = 0.1 * jax.random.normal(keys[k], (vocab, D), jnp.float32); k += 1
    # TODO(synk): classifier is an external module; stand-in = Linear(concat(first, second)).
    params["clf_W"] = jax.random.uniform(keys[k], (2 * D, num_classes), jnp.float32, -stdv, stdv); k += 1
    params["clf_b"] = jax.random.uniform(keys[k], (1, num_classes), jnp.float32, -stdv, stdv)
    return params


def _pack_params(params, *, mxu_dtype):
    """Stack per-layer fw/bw weights into (L, 2H, 2H)/(L, 1, 2H); lane-pad classifier.

    W_all / clf_W are stored in `mxu_dtype` AT REST (bf16 by default -> halves
    weight DMA); biases stay f32 (f32 accumulation + f32 bias/ReLU in-kernel).
    """
    L = len(params["W_fw"])
    w_all = jnp.stack([jnp.concatenate([params["W_fw"][l], params["W_bw"][l]], axis=1)
                       for l in range(L)], axis=0).astype(mxu_dtype)      # (L, 2H, 2H)
    b_all = jnp.stack([jnp.concatenate([params["b_fw"][l], params["b_bw"][l]], axis=1)
                       for l in range(L)], axis=0)                        # (L, 1, 2H) f32
    clf_w, clf_b = params["clf_W"], params["clf_b"]
    c = clf_w.shape[1]
    c_pad = _round_up(c, 128)                 # lane-dense output slab -> no masked stores
    clf_w = jnp.pad(clf_w, ((0, 0), (0, c_pad - c))).astype(mxu_dtype)
    clf_b = jnp.pad(clf_b, ((0, 0), (0, c_pad - c)))                      # f32
    return w_all, b_all, clf_w, clf_b, c, c_pad


def _build_span_selector(instances, B, N, b_pad):
    """Stacked (2*B_pad, B*N) mean-pooling matrix: rows [0, B) = first entity,
    rows [B_pad, B_pad+B) = second entity, remaining rows zero (sublane pad)."""
    sel = np.zeros((2 * b_pad, B * N), np.float32)
    for b, (fs, fe, ss, se) in enumerate(instances):
        flen = max(fe - fs, 1)                # guard: empty span -> no div-by-zero
        slen = max(se - ss, 1)
        sel[b, b * N + fs + 1: b * N + fe + 1] = 1.0 / float(flen)
        sel[b_pad + b, b * N + ss + 1: b * N + se + 1] = 1.0 / float(slen)
    return jnp.asarray(sel)


def build_relnet_forward(params, instances, *, batch, seq, num_dep_rels,
                         gcn_layer, mxu_dtype=jnp.bfloat16):
    """Do ALL host-side packing once; return a jitted per-call forward(word_graph)."""
    B, N = batch, seq
    D = params["base_emb"].shape[1]           # 2H

    # --- parser branch: config.parser_equal_probs == True ---
    # energy = full((B, R, N, N), 1/(N*R)) is a compile-time constant, so
    # marginal = R * average_prob = 1/N everywhere and
    # dep_fw == dep_bw == adj_c * ones(N, N) + I.  Nothing is materialized.
    # TODO(synk): the learned parser.get_probs / one_best MST path is external.
    average_prob = 1.0 / (N * num_dep_rels)
    adj_c = float(num_dep_rels * average_prob)          # == 1 / N

    w_all, b_all, clf_w, clf_b, num_classes, c_pad = _pack_params(params, mxu_dtype=mxu_dtype)
    b_pad = _round_up(B, 8)                   # sublane-dense output slab
    sel_all = _build_span_selector(instances, B, N, b_pad)
    base_emb = params["base_emb"]             # f32 activations (tiny)

    kernel = partial(_fused_relnet_kernel, num_layers=gcn_layer, batch=B, seq=N,
                     b_pad=b_pad, adj_c=adj_c, mxu_dtype=mxu_dtype)

    # TODO(synk): when B*N grows into the ~1-2K row range, add a ("parallel",)
    #             row grid (or pl.core_map) so both v7x TensorCores get work;
    #             at B*N=32 any grid is pure per-step overhead.
    fused_call = pl.pallas_call(
        kernel,
        out_shape=jax.ShapeDtypeStruct((b_pad, c_pad), jnp.float32),
        in_specs=[
            pl.BlockSpec(memory_space=pltpu.MemorySpace.SMEM),   # word_graph indices
            pl.BlockSpec(memory_space=pltpu.MemorySpace.VMEM),   # base_emb
            pl.BlockSpec(memory_space=pltpu.MemorySpace.VMEM),   # W_all
            pl.BlockSpec(memory_space=pltpu.MemorySpace.VMEM),   # b_all
            pl.BlockSpec(memory_space=pltpu.MemorySpace.VMEM),   # sel_all
            pl.BlockSpec(memory_space=pltpu.MemorySpace.VMEM),   # clf_W
            pl.BlockSpec(memory_space=pltpu.MemorySpace.VMEM),   # clf_b
        ],
        out_specs=pl.BlockSpec(memory_space=pltpu.MemorySpace.VMEM),
        scratch_shapes=[pltpu.VMEM((B * N, D), jnp.float32)],
    )
    # TODO(synk): if this forward runs repeatedly behind an external encoder, a
    #             cross-pallas_call weight-prefetch future (P10) would hide the
    #             remaining weight DMA behind the encoder's compute.

    @jax.jit
    def forward(word_graph):
        wg = word_graph.reshape(-1).astype(jnp.int32)     # (B*N,) -> SMEM
        out_pad = fused_call(wg, base_emb, w_all, b_all, sel_all, clf_w, clf_b)
        # nn.Dropout in eval mode is identity.
        return out_pad[:B, :num_classes]

    return forward


# ----------------------------------------------------------------------------
# Pure-JAX reference (numerical sanity check)
# ----------------------------------------------------------------------------

def _gcn_ref(inp, adj, W, b):
    out = inp @ W + b.reshape(-1)
    out = jnp.matmul(adj, out)
    return jnp.maximum(out, 0.0)


def rel_network_reference(params, word, word_graph, instances, *, num_dep_rels, gcn_layer):
    B, N = word.shape
    energy = jnp.full((B, num_dep_rels, N, N), 1.0 / (N * num_dep_rels), jnp.float32)
    word_h = params["base_emb"][word_graph]
    marg = jnp.transpose(energy, (0, 2, 3, 1)).sum(axis=3)
    eye = jnp.eye(N, dtype=jnp.float32)
    dep_fw = marg + eye
    dep_bw = jnp.transpose(marg, (0, 2, 1)) + eye
    for i in range(gcn_layer):
        out_fw = _gcn_ref(word_h, dep_fw, params["W_fw"][i], params["b_fw"][i])
        out_bw = _gcn_ref(word_h, dep_bw, params["W_bw"][i], params["b_bw"][i])
        word_h = jnp.concatenate([out_fw, out_bw], axis=2)
    output = word_h
    firsts, seconds = [], []
    for idx, (fs, fe, ss, se) in enumerate(instances):
        firsts.append(jnp.mean(output[idx, fs + 1:fe + 1], axis=-2))
        seconds.append(jnp.mean(output[idx, ss + 1:se + 1], axis=-2))
    feats = jnp.concatenate([jnp.stack(firsts, 0), jnp.stack(seconds, 0)], axis=-1)
    return feats @ params["clf_W"] + params["clf_b"].reshape(-1)


# ----------------------------------------------------------------------------
# Main
# ----------------------------------------------------------------------------

if __name__ == "__main__":
    B = 2            # batch
    N = 16           # sequence length
    HID = 128        # GCNRel hid_size  (word_h feature dim = 2*HID = 256)
    R = 4            # num_dep_rels
    LAYERS = 2       # gcn_layer
    VOCAB = 50
    NUM_CLASSES = 8

    key = jax.random.PRNGKey(0)
    k_param, k_word, k_wordg = jax.random.split(key, 3)

    params = init_params(k_param, hid_size=HID, gcn_layer=LAYERS,
                         vocab=VOCAB, num_classes=NUM_CLASSES)

    word = jax.random.randint(k_word, (B, N), 0, VOCAB)
    word_graph = jax.random.randint(k_wordg, (B, N), 0, VOCAB)
    # instances: (first_word_start, first_word_end, second_word_start, second_word_end)
    instances = [(1, 4, 6, 9), (2, 5, 8, 12)]

    ref = rel_network_reference(params, word, word_graph, instances,
                                num_dep_rels=R, gcn_layer=LAYERS)
    ref = jax.block_until_ready(ref)

    # Default path: bf16 MXU operands, bf16 weights at rest, f32 accumulation.
    fwd_bf16 = build_relnet_forward(params, instances, batch=B, seq=N,
                                    num_dep_rels=R, gcn_layer=LAYERS,
                                    mxu_dtype=jnp.bfloat16)
    pred_bf16 = jax.block_until_ready(fwd_bf16(word_graph))
    assert pred_bf16.shape == (B, NUM_CLASSES)
    assert jnp.allclose(pred_bf16, ref, atol=5e-2, rtol=5e-2), (
        f"bf16 mismatch: max err {jnp.max(jnp.abs(pred_bf16 - ref))}")

    # f32-operand sanity path (same default MXU precision as the XLA reference).
    fwd_f32 = build_relnet_forward(params, instances, batch=B, seq=N,
                                   num_dep_rels=R, gcn_layer=LAYERS,
                                   mxu_dtype=jnp.float32)
    pred_f32 = jax.block_until_ready(fwd_f32(word_graph))
    assert pred_f32.shape == (B, NUM_CLASSES)
    assert jnp.allclose(pred_f32, ref, atol=1e-3, rtol=1e-3), (
        f"f32 mismatch: max err {jnp.max(jnp.abs(pred_f32 - ref))}")

    # Second call exercises the cached / jitted per-call path (no host packing).
    pred_again = jax.block_until_ready(fwd_bf16(word_graph))
    assert jnp.allclose(pred_again, pred_bf16)

    print("KERNEL_OK")
</pallas_src>

<mosaic_0001>
module attributes {stable_mosaic.version = 11 : i64} {
  func.func @_fused_relnet_kernel(%arg0: memref<32xi32, #tpu.memory_space<smem>>, %arg1: memref<50x256xf32, #tpu.memory_space<vmem>>, %arg2: memref<2x256x256xbf16, #tpu.memory_space<vmem>>, %arg3: memref<2x1x256xf32, #tpu.memory_space<vmem>>, %arg4: memref<16x32xf32, #tpu.memory_space<vmem>>, %arg5: memref<512x128xbf16, #tpu.memory_space<vmem>>, %arg6: memref<1x128xf32, #tpu.memory_space<vmem>>, %arg7: memref<8x128xf32, #tpu.memory_space<vmem>>, %arg8: memref<32x256xf32, #tpu.memory_space<vmem>>) attributes {dimension_semantics = [], scalar_prefetch = 0 : i64, scratch_operands = 1 : i64, tpu.core_type = #tpu.core_type<tc>} {
    %c0 = arith.constant 0 : index
    %0 = memref.load %arg0[%c0] : memref<32xi32, #tpu.memory_space<smem>>
    %1 = arith.index_cast %0 : i32 to index
    %c0_0 = arith.constant 0 : index
    %2 = vector.load %arg1[%1, %c0_0] : memref<50x256xf32, #tpu.memory_space<vmem>>, vector<1x256xf32>
    %c0_1 = arith.constant 0 : index
    %c0_2 = arith.constant 0 : index
    %3 = vector.load %arg8[%c0_1, %c0_2] : memref<32x256xf32, #tpu.memory_space<vmem>>, vector<1x256xf32>
    tpu.vector_store %arg8[%c0_1, %c0_2], %2 {strides = array<i32>} : memref<32x256xf32, #tpu.memory_space<vmem>>, vector<1x256xf32>,
    %c1 = arith.constant 1 : index
    %4 = memref.load %arg0[%c1] : memref<32xi32, #tpu.memory_space<smem>>
    %5 = arith.index_cast %4 : i32 to index
    %c0_3 = arith.constant 0 : index
    %6 = vector.load %arg1[%5, %c0_3] : memref<50x256xf32, #tpu.memory_space<vmem>>, vector<1x256xf32>
    %c1_4 = arith.constant 1 : index
    %c0_5 = arith.constant 0 : index
    %7 = vector.load %arg8[%c1_4, %c0_5] : memref<32x256xf32, #tpu.memory_space<vmem>>, vector<1x256xf32>
    tpu.vector_store %arg8[%c1_4, %c0_5], %6 {strides = array<i32>} : memref<32x256xf32, #tpu.memory_space<vmem>>, vector<1x256xf32>,
    %c2 = arith.constant 2 : index
    %8 = memref.load %arg0[%c2] : memref<32xi32, #tpu.memory_space<smem>>
    %9 = arith.index_cast %8 : i32 to index
    %c0_6 = arith.constant 0 : index
    %10 = vector.load %arg1[%9, %c0_6] : memref<50x256xf32, #tpu.memory_space<vmem>>, vector<1x256xf32>
    %c2_7 = arith.constant 2 : index
    %c0_8 = arith.constant 0 : index
    %11 = vector.load %arg8[%c2_7, %c0_8] : memref<32x256xf32, #tpu.memory_space<vmem>>, vector<1x256xf32>
    tpu.vector_store %arg8[%c2_7, %c0_8], %10 {strides = array<i32>} : memref<32x256xf32, #tpu.memory_space<vmem>>, vector<1x256xf32>,
    %c3 = arith.constant 3 : index
    %12 = memref.load %arg0[%c3] : memref<32xi32, #tpu.memory_space<smem>>
    %13 = arith.index_cast %12 : i32 to index
    %c0_9 = arith.constant 0 : index
    %14 = vector.load %arg1[%13, %c0_9] : memref<50x256xf32, #tpu.memory_space<vmem>>, vector<1x256xf32>
    %c3_10 = arith.constant 3 : index
    %c0_11 = arith.constant 0 : index
    %15 = vector.load %arg8[%c3_10, %c0_11] : memref<32x256xf32, #tpu.memory_space<vmem>>, vector<1x256xf32>
    tpu.vector_store %arg8[%c3_10, %c0_11], %14 {strides = array<i32>} : memref<32x256xf32, #tpu.memory_space<vmem>>, vector<1x256xf32>,
    %c4 = arith.constant 4 : index
    %16 = memref.load %arg0[%c4] : memref<32xi32, #tpu.memory_space<smem>>
    %17 = arith.index_cast %16 : i32 to index
    %c0_12 = arith.constant 0 : index
    %18 = vector.load %arg1[%17, %c0_12] : memref<50x256xf32, #tpu.memory_space<vmem>>, vector<1x256xf32>
    %c4_13 = arith.constant 4 : index
    %c0_14 = arith.constant 0 : index
    %19 = vector.load %arg8[%c4_13, %c0_14] : memref<32x256xf32, #tpu.memory_space<vmem>>, vector<1x256xf32>
    tpu.vector_store %arg8[%c4_13, %c0_14], %18 {strides = array<i32>} : memref<32x256xf32, #tpu.memory_space<vmem>>, vector<1x256xf32>,
    %c5 = arith.constant 5 : index
    %20 = memref.load %arg0[%c5] : memref<32xi32, #tpu.memory_space<smem>>
    %21 = arith.index_cast %20 : i32 to index
    %c0_15 = arith.constant 0 : index
    %22 = vector.load %arg1[%21, %c0_15] : memref<50x256xf32, #tpu.memory_space<vmem>>, vector<1x256xf32>
    %c5_16 = arith.constant 5 : index
    %c0_17 = arith.constant 0 : index
    %23 = vector.load %arg8[%c5_16, %c0_17] : memref<32x256xf32, #tpu.memory_space<vmem>>, vector<1x256xf32>
    tpu.vector_store %arg8[%c5_16, %c0_17], %22 {strides = array<i32>} : memref<32x256xf32, #tpu.memory_space<vmem>>, vector<1x256xf32>,
    %c6 = arith.constant 6 : index
    %24 = memref.load %arg0[%c6] : memref<32xi32, #tpu.memory_space<smem>>
    %25 = arith.index_cast %24 : i32 to index
    %c0_18 = arith.constant 0 : index
    %26 = vector.load %arg1[%25, %c0_18] : memref<50x256xf32, #tpu.memory_space<vmem>>, vector<1x256xf32>
    %c6_19 = arith.constant 6 : index
    %c0_20 = arith.constant 0 : index
    %27 = vector.load %arg8[%c6_19, %c0_20] : memref<32x256xf32, #tpu.memory_space<vmem>>, vector<1x256xf32>
    tpu.vector_store %arg8[%c6_19, %c0_20], %26 {strides = array<i32>} : memref<32x256xf32, #tpu.memory_space<vmem>>, vector<1x256xf32>,
    %c7 = arith.constant 7 : index
    %28 = memref.load %arg0[%c7] : memref<32xi32, #tpu.memory_space<smem>>
    %29 = arith.index_cast %28 : i32 to index
    %c0_21 = arith.constant 0 : index
    %30 = vector.load %arg1[%29, %c0_21] : memref<50x256xf32, #tpu.memory_space<vmem>>, vector<1x256xf32>
    %c7_22 = arith.constant 7 : index
    %c0_23 = arith.constant 0 : index
    %31 = vector.load %arg8[%c7_22, %c0_23] : memref<32x256xf32, #tpu.memory_space<vmem>>, vector<1x256xf32>
    tpu.vector_store %arg8[%c7_22, %c0_23], %30 {strides = array<i32>} : memref<32x256xf32, #tpu.memory_space<vmem>>, vector<1x256xf32>,
    %c8 = arith.constant 8 : index
    %32 = memref.load %arg0[%c8] : memref<32xi32, #tpu.memory_space<smem>>
    %33 = arith.index_cast %32 : i32 to index
    %c0_24 = arith.constant 0 : index
    %34 = vector.load %arg1[%33, %c0_24] : memref<50x256xf32, #tpu.memory_space<vmem>>, vector<1x256xf32>
    %c8_25 = arith.constant 8 : index
    %c0_26 = arith.constant 0 : index
    %35 = vector.load %arg8[%c8_25, %c0_26] : memref<32x256xf32, #tpu.memory_space<vmem>>, vector<1x256xf32>
    tpu.vector_store %arg8[%c8_25, %c0_26], %34 {strides = array<i32>} : memref<32x256xf32, #tpu.memory_space<vmem>>, vector<1x256xf32>,
    %c9 = arith.constant 9 : index
    %36 = memref.load %arg0[%c9] : memref<32xi32, #tpu.memory_space<smem>>
    %37 = arith.index_cast %36 : i32 to index
    %c0_27 = arith.constant 0 : index
    %38 = vector.load %arg1[%37, %c0_27] : memref<50x256xf32, #tpu.memory_space<vmem>>, vector<1x256xf32>
    %c9_28 = arith.constant 9 : index
    %c0_29 = arith.constant 0 : index
    %39 = vector.load %arg8[%c9_28, %c0_29] : memref<32x256xf32, #tpu.memory_space<vmem>>, vector<1x256xf32>
    tpu.vector_store %arg8[%c9_28, %c0_29], %38 {strides = array<i32>} : memref<32x256xf32, #tpu.memory_space<vmem>>, vector<1x256xf32>,
    %c10 = arith.constant 10 : index
    %40 = memref.load %arg0[%c10] : memref<32xi32, #tpu.memory_space<smem>>
    %41 = arith.index_cast %40 : i32 to index
    %c0_30 = arith.constant 0 : index
    %42 = vector.load %arg1[%41, %c0_30] : memref<50x256xf32, #tpu.memory_space<vmem>>, vector<1x256xf32>
    %c10_31 = arith.constant 10 : index
    %c0_32 = arith.constant 0 : index
    %43 = vector.load %arg8[%c10_31, %c0_32] : memref<32x256xf32, #tpu.memory_space<vmem>>, vector<1x256xf32>
    tpu.vector_store %arg8[%c10_31, %c0_32], %42 {strides = array<i32>} : memref<32x256xf32, #tpu.memory_space<vmem>>, vector<1x256xf32>,
    %c11 = arith.constant 11 : index
    %44 = memref.load %arg0[%c11] : memref<32xi32, #tpu.memory_space<smem>>
    %45 = arith.index_cast %44 : i32 to index
    %c0_33 = arith.constant 0 : index
    %46 = vector.load %arg1[%45, %c0_33] : memref<50x256xf32, #tpu.memory_space<vmem>>, vector<1x256xf32>
    %c11_34 = arith.constant 11 : index
    %c0_35 = arith.constant 0 : index
    %47 = vector.load %arg8[%c11_34, %c0_35] : memref<32x256xf32, #tpu.memory_space<vmem>>, vector<1x256xf32>
    tpu.vector_store %arg8[%c11_34, %c0_35], %46 {strides = array<i32>} : memref<32x256xf32, #tpu.memory_space<vmem>>, vector<1x256xf32>,
    %c12 = arith.constant 12 : index
    %48 = memref.load %arg0[%c12] : memref<32xi32, #tpu.memory_space<smem>>
    %49 = arith.index_cast %48 : i32 to index
    %c0_36 = arith.constant 0 : index
    %50 = vector.load %arg1[%49, %c0_36] : memref<50x256xf32, #tpu.memory_space<vmem>>, vector<1x256xf32>
    %c12_37 = arith.constant 12 : index
    %c0_38 = arith.constant 0 : index
    %51 = vector.load %arg8[%c12_37, %c0_38] : memref<32x256xf32, #tpu.memory_space<vmem>>, vector<1x256xf32>
    tpu.vector_store %arg8[%c12_37, %c0_38], %50 {strides = array<i32>} : memref<32x256xf32, #tpu.memory_space<vmem>>, vector<1x256xf32>,
    %c13 = arith.constant 13 : index
    %52 = memref.load %arg0[%c13] : memref<32xi32, #tpu.memory_space<smem>>
    %53 = arith.index_cast %52 : i32 to index
    %c0_39 = arith.constant 0 : index
    %54 = vector.load %arg1[%53, %c0_39] : memref<50x256xf32, #tpu.memory_space<vmem>>, vector<1x256xf32>
    %c13_40 = arith.constant 13 : index
    %c0_41 = arith.constant 0 : index
    %55 = vector.load %arg8[%c13_40, %c0_41] : memref<32x256xf32, #tpu.memory_space<vmem>>, vector<1x256xf32>
    tpu.vector_store %arg8[%c13_40, %c0_41], %54 {strides = array<i32>} : memref<32x256xf32, #tpu.memory_space<vmem>>, vector<1x256xf32>,
    %c14 = arith.constant 14 : index
    %56 = memref.load %arg0[%c14] : memref<32xi32, #tpu.memory_space<smem>>
    %57 = arith.index_cast %56 : i32 to index
    %c0_42 = arith.constant 0 : index
    %58 = vector.load %arg1[%57, %c0_42] : memref<50x256xf32, #tpu.memory_space<vmem>>, vector<1x256xf32>
    %c14_43 = arith.constant 14 : index
    %c0_44 = arith.constant 0 : index
    %59 = vector.load %arg8[%c14_43, %c0_44] : memref<32x256xf32, #tpu.memory_space<vmem>>, vector<1x256xf32>
    tpu.vector_store %arg8[%c14_43, %c0_44], %58 {strides = array<i32>} : memref<32x256xf32, #tpu.memory_space<vmem>>, vector<1x256xf32>,
    %c15 = arith.constant 15 : index
    %60 = memref.load %arg0[%c15] : memref<32xi32, #tpu.memory_space<smem>>
    %61 = arith.index_cast %60 : i32 to index
    %c0_45 = arith.constant 0 : index
    %62 = vector.load %arg1[%61, %c0_45] : memref<50x256xf32, #tpu.memory_space<vmem>>, vector<1x256xf32>
    %c15_46 = arith.constant 15 : index
    %c0_47 = arith.constant 0 : index
    %63 = vector.load %arg8[%c15_46, %c0_47] : memref<32x256xf32, #tpu.memory_space<vmem>>, vector<1x256xf32>
    tpu.vector_store %arg8[%c15_46, %c0_47], %62 {strides = array<i32>} : memref<32x256xf32, #tpu.memory_space<vmem>>, vector<1x256xf32>,
    %c16 = arith.constant 16 : index
    %64 = memref.load %arg0[%c16] : memref<32xi32, #tpu.memory_space<smem>>
    %65 = arith.index_cast %64 : i32 to index
    %c0_48 = arith.constant 0 : index
    %66 = vector.load %arg1[%65, %c0_48] : memref<50x256xf32, #tpu.memory_space<vmem>>, vector<1x256xf32>
    %c16_49 = arith.constant 16 : index
    %c0_50 = arith.constant 0 : index
    %67 = vector.load %arg8[%c16_49, %c0_50] : memref<32x256xf32, #tpu.memory_space<vmem>>, vector<1x256xf32>
    tpu.vector_store %arg8[%c16_49, %c0_50], %66 {strides = array<i32>} : memref<32x256xf32, #tpu.memory_space<vmem>>, vector<1x256xf32>,
    %c17 = arith.constant 17 : index
    %68 = memref.load %arg0[%c17] : memref<32xi32, #tpu.memory_space<smem>>
    %69 = arith.index_cast %68 : i32 to index
    %c0_51 = arith.constant 0 : index
    %70 = vector.load %arg1[%69, %c0_51] : memref<50x256xf32, #tpu.memory_space<vmem>>, vector<1x256xf32>
    %c17_52 = arith.constant 17 : index
    %c0_53 = arith.constant 0 : index
    %71 = vector.load %arg8[%c17_52, %c0_53] : memref<32x256xf32, #tpu.memory_space<vmem>>, vector<1x256xf32>
    tpu.vector_store %arg8[%c17_52, %c0_53], %70 {strides = array<i32>} : memref<32x256xf32, #tpu.memory_space<vmem>>, vector<1x256xf32>,
    %c18 = arith.constant 18 : index
    %72 = memref.load %arg0[%c18] : memref<32xi32, #tpu.memory_space<smem>>
    %73 = arith.index_cast %72 : i32 to index
    %c0_54 = arith.constant 0 : index
    %74 = vector.load %arg1[%73, %c0_54] : memref<50x256xf32, #tpu.memory_space<vmem>>, vector<1x256xf32>
    %c18_55 = arith.constant 18 : index
    %c0_56 = arith.constant 0 : index
    %75 = vector.load %arg8[%c18_55, %c0_56] : memref<32x256xf32, #tpu.memory_space<vmem>>, vector<1x256xf32>
    tpu.vector_store %arg8[%c18_55, %c0_56], %74 {strides = array<i32>} : memref<32x256xf32, #tpu.memory_space<vmem>>, vector<1x256xf32>,
    %c19 = arith.constant 19 : index
    %76 = memref.load %arg0[%c19] : memref<32xi32, #tpu.memory_space<smem>>
    %77 = arith.index_cast %76 : i32 to index
    %c0_57 = arith.constant 0 : index
    %78 = vector.load %arg1[%77, %c0_57] : memref<50x256xf32, #tpu.memory_space<vmem>>, vector<1x256xf32>
    %c19_58 = arith.constant 19 : index
    %c0_59 = arith.constant 0 : index
    %79 = vector.load %arg8[%c19_58, %c0_59] : memref<32x256xf32, #tpu.memory_space<vmem>>, vector<1x256xf32>
    tpu.vector_store %arg8[%c19_58, %c0_59], %78 {strides = array<i32>} : memref<32x256xf32, #tpu.memory_space<vmem>>, vector<1x256xf32>,
    %c20 = arith.constant 20 : index
    %80 = memref.load %arg0[%c20] : memref<32xi32, #tpu.memory_space<smem>>
    %81 = arith.index_cast %80 : i32 to index
    %c0_60 = arith.constant 0 : index
    %82 = vector.load %arg1[%81, %c0_60] : memref<50x256xf32, #tpu.memory_space<vmem>>, vector<1x256xf32>
    %c20_61 = arith.constant 20 : index
    %c0_62 = arith.constant 0 : index
    %83 = vector.load %arg8[%c20_61, %c0_62] : memref<32x256xf32, #tpu.memory_space<vmem>>, vector<1x256xf32>
    tpu.vector_store %arg8[%c20_61, %c0_62], %82 {strides = array<i32>} : memref<32x256xf32, #tpu.memory_space<vmem>>, vector<1x256xf32>,
    %c21 = arith.constant 21 : index
    %84 = memref.load %arg0[%c21] : memref<32xi32, #tpu.memory_space<smem>>
    %85 = arith.index_cast %84 : i32 to index
    %c0_63 = arith.constant 0 : index
    %86 = vector.load %arg1[%85, %c0_63] : memref<50x256xf32, #tpu.memory_space<vmem>>, vector<1x256xf32>
    %c21_64 = arith.constant 21 : index
    %c0_65 = arith.constant 0 : index
    %87 = vector.load %arg8[%c21_64, %c0_65] : memref<32x256xf32, #tpu.memory_space<vmem>>, vector<1x256xf32>
    tpu.vector_store %arg8[%c21_64, %c0_65], %86 {strides = array<i32>} : memref<32x256xf32, #tpu.memory_space<vmem>>, vector<1x256xf32>,
    %c22 = arith.constant 22 : index
    %88 = memref.load %arg0[%c22] : memref<32xi32, #tpu.memory_space<smem>>
    %89 = arith.index_cast %88 : i32 to index
    %c0_66 = arith.constant 0 : index
    %90 = vector.load %arg1[%89, %c0_66] : memref<50x256xf32, #tpu.memory_space<vmem>>, vector<1x256xf32>
    %c22_67 = arith.constant 22 : index
    %c0_68 = arith.constant 0 : index
    %91 = vector.load %arg8[%c22_67, %c0_68] : memref<32x256xf32, #tpu.memory_space<vmem>>, vector<1x256xf32>
    tpu.vector_store %arg8[%c22_67, %c0_68], %90 {strides = array<i32>} : memref<32x256xf32, #tpu.memory_space<vmem>>, vector<1x256xf32>,
    %c23 = arith.constant 23 : index
    %92 = memref.load %arg0[%c23] : memref<32xi32, #tpu.memory_space<smem>>
    %93 = arith.index_cast %92 : i32 to index
    %c0_69 = arith.constant 0 : index
    %94 = vector.load %arg1[%93, %c0_69] : memref<50x256xf32, #tpu.memory_space<vmem>>, vector<1x256xf32>
    %c23_70 = arith.constant 23 : index
    %c0_71 = arith.constant 0 : index
    %95 = vector.load %arg8[%c23_70, %c0_71] : memref<32x256xf32, #tpu.memory_space<vmem>>, vector<1x256xf32>
    tpu.vector_store %arg8[%c23_70, %c0_71], %94 {strides = array<i32>} : memref<32x256xf32, #tpu.memory_space<vmem>>, vector<1x256xf32>,
    %c24 = arith.constant 24 : index
    %96 = memref.load %arg0[%c24] : memref<32xi32, #tpu.memory_space<smem>>
    %97 = arith.index_cast %96 : i32 to index
    %c0_72 = arith.constant 0 : index
    %98 = vector.load %arg1[%97, %c0_72] : memref<50x256xf32, #tpu.memory_space<vmem>>, vector<1x256xf32>
    %c24_73 = arith.constant 24 : index
    %c0_74 = arith.constant 0 : index
    %99 = vector.load %arg8[%c24_73, %c0_74] : memref<32x256xf32, #tpu.memory_space<vmem>>, vector<1x256xf32>
    tpu.vector_store %arg8[%c24_73, %c0_74], %98 {strides = array<i32>} : memref<32x256xf32, #tpu.memory_space<vmem>>, vector<1x256xf32>,
    %c25 = arith.constant 25 : index
    %100 = memref.load %arg0[%c25] : memref<32xi32, #tpu.memory_space<smem>>
    %101 = arith.index_cast %100 : i32 to index
    %c0_75 = arith.constant 0 : index
    %102 = vector.load %arg1[%101, %c0_75] : memref<50x256xf32, #tpu.memory_space<vmem>>, vector<1x256xf32>
    %c25_76 = arith.constant 25 : index
    %c0_77 = arith.constant 0 : index
    %103 = vector.load %arg8[%c25_76, %c0_77] : memref<32x256xf32, #tpu.memory_space<vmem>>, vector<1x256xf32>
    tpu.vector_store %arg8[%c25_76, %c0_77], %102 {strides = array<i32>} : memref<32x256xf32, #tpu.memory_space<vmem>>, vector<1x256xf32>,
    %c26 = arith.constant 26 : index
    %104 = memref.load %arg0[%c26] : memref<32xi32, #tpu.memory_space<smem>>
    %105 = arith.index_cast %104 : i32 to index
    %c0_78 = arith.constant 0 : index
    %106 = vector.load %arg1[%105, %c0_78] : memref<50x256xf32, #tpu.memory_space<vmem>>, vector<1x256xf32>
    %c26_79 = arith.constant 26 : index
    %c0_80 = arith.constant 0 : index
    %107 = vector.load %arg8[%c26_79, %c0_80] : memref<32x256xf32, #tpu.memory_space<vmem>>, vector<1x256xf32>
    tpu.vector_store %arg8[%c26_79, %c0_80], %106 {strides = array<i32>} : memref<32x256xf32, #tpu.memory_space<vmem>>, vector<1x256xf32>,
    %c27 = arith.constant 27 : index
    %108 = memref.load %arg0[%c27] : memref<32xi32, #tpu.memory_space<smem>>
    %109 = arith.index_cast %108 : i32 to index
    %c0_81 = arith.constant 0 : index
    %110 = vector.load %arg1[%109, %c0_81] : memref<50x256xf32, #tpu.memory_space<vmem>>, vector<1x256xf32>
    %c27_82 = arith.constant 27 : index
    %c0_83 = arith.constant 0 : index
    %111 = vector.load %arg8[%c27_82, %c0_83] : memref<32x256xf32, #tpu.memory_space<vmem>>, vector<1x256xf32>
    tpu.vector_store %arg8[%c27_82, %c0_83], %110 {strides = array<i32>} : memref<32x256xf32, #tpu.memory_space<vmem>>, vector<1x256xf32>,
    %c28 = arith.constant 28 : index
    %112 = memref.load %arg0[%c28] : memref<32xi32, #tpu.memory_space<smem>>
    %113 = arith.index_cast %112 : i32 to index
    %c0_84 = arith.constant 0 : index
    %114 = vector.load %arg1[%113, %c0_84] : memref<50x256xf32, #tpu.memory_space<vmem>>, vector<1x256xf32>
    %c28_85 = arith.constant 28 : index
    %c0_86 = arith.constant 0 : index
    %115 = vector.load %arg8[%c28_85, %c0_86] : memref<32x256xf32, #tpu.memory_space<vmem>>, vector<1x256xf32>
    tpu.vector_store %arg8[%c28_85, %c0_86], %114 {strides = array<i32>} : memref<32x256xf32, #tpu.memory_space<vmem>>, vector<1x256xf32>,
    %c29 = arith.constant 29 : index
    %116 = memref.load %arg0[%c29] : memref<32xi32, #tpu.memory_space<smem>>
    %117 = arith.index_cast %116 : i32 to index
    %c0_87 = arith.constant 0 : index
    %118 = vector.load %arg1[%117, %c0_87] : memref<50x256xf32, #tpu.memory_space<vmem>>, vector<1x256xf32>
    %c29_88 = arith.constant 29 : index
    %c0_89 = arith.constant 0 : index
    %119 = vector.load %arg8[%c29_88, %c0_89] : memref<32x256xf32, #tpu.memory_space<vmem>>, vector<1x256xf32>
    tpu.vector_store %arg8[%c29_88, %c0_89], %118 {strides = array<i32>} : memref<32x256xf32, #tpu.memory_space<vmem>>, vector<1x256xf32>,
    %c30 = arith.constant 30 : index
    %120 = memref.load %arg0[%c30] : memref<32xi32, #tpu.memory_space<smem>>
    %121 = arith.index_cast %120 : i32 to index
    %c0_90 = arith.constant 0 : index
    %122 = vector.load %arg1[%121, %c0_90] : memref<50x256xf32, #tpu.memory_space<vmem>>, vector<1x256xf32>
    %c30_91 = arith.constant 30 : index
    %c0_92 = arith.constant 0 : index
    %123 = vector.load %arg8[%c30_91, %c0_92] : memref<32x256xf32, #tpu.memory_space<vmem>>, vector<1x256xf32>
    tpu.vector_store %arg8[%c30_91, %c0_92], %122 {strides = array<i32>} : memref<32x256xf32, #tpu.memory_space<vmem>>, vector<1x256xf32>,
    %c31 = arith.constant 31 : index
    %124 = memref.load %arg0[%c31] : memref<32xi32, #tpu.memory_space<smem>>
    %125 = arith.index_cast %124 : i32 to index
    %c0_93 = arith.constant 0 : index
    %126 = vector.load %arg1[%125, %c0_93] : memref<50x256xf32, #tpu.memory_space<vmem>>, vector<1x256xf32>
    %c31_94 = arith.constant 31 : index
    %c0_95 = arith.constant 0 : index
    %127 = vector.load %arg8[%c31_94, %c0_95] : memref<32x256xf32, #tpu.memory_space<vmem>>, vector<1x256xf32>
    tpu.vector_store %arg8[%c31_94, %c0_95], %126 {strides = array<i32>} : memref<32x256xf32, #tpu.memory_space<vmem>>, vector<1x256xf32>,
    %c0_96 = arith.constant 0 : index
    %c0_97 = arith.constant 0 : index
    %128 = vector.load %arg8[%c0_96, %c0_97] : memref<32x256xf32, #tpu.memory_space<vmem>>, vector<32x256xf32>
    %c0_98 = arith.constant 0 : index
    %c0_99 = arith.constant 0 : index
    %c0_100 = arith.constant 0 : index
    %129 = vector.load %arg2[%c0_98, %c0_99, %c0_100] : memref<2x256x256xbf16, #tpu.memory_space<vmem>>, vector<1x256x256xbf16>
    %130 = vector.shape_cast %129 : vector<1x256x256xbf16> to vector<256x256xbf16>
    %131 = arith.truncf %128 : vector<32x256xf32> to vector<32x256xbf16>
    %cst = arith.constant dense<0.000000e+00> : vector<32x256xf32>
    %132 = tpu.matmul %131, %130, %cst {dimension_numbers = #tpu.dot_dimension_numbers<[1], [0], [0], [1], [0, 0, 1, 1], [], []>} : vector<32x256xbf16>, vector<256x256xbf16>, vector<32x256xf32> -> vector<32x256xf32>
    %c0_101 = arith.constant 0 : index
    %c0_102 = arith.constant 0 : index
    %c0_103 = arith.constant 0 : index
    %133 = vector.load %arg3[%c0_101, %c0_102, %c0_103] : memref<2x1x256xf32, #tpu.memory_space<vmem>>, vector<1x1x256xf32>
    %134 = vector.shape_cast %133 : vector<1x1x256xf32> to vector<1x256xf32>
    %135 = vector.broadcast %134 : vector<1x256xf32> to vector<32x256xf32>
    %136 = arith.addf %132, %135 : vector<32x256xf32>
    %137 = vector.shape_cast %136 : vector<32x256xf32> to vector<2x16x256xf32>
    %cst_104 = arith.constant dense<0.000000e+00> : vector<2x256xf32>
    %138 = vector.multi_reduction <add>, %137, %cst_104 [1] : vector<2x16x256xf32> to vector<2x256xf32>
    %139 = vector.shape_cast %138 : vector<2x256xf32> to vector<2x1x256xf32>
    %cst_105 = arith.constant 6.250000e-02 : f32
    %140 = vector.broadcast %cst_105 : f32 to vector<2x1x256xf32>
    %141 = arith.mulf %140, %139 : vector<2x1x256xf32>
    %142 = vector.broadcast %141 : vector<2x1x256xf32> to vector<2x16x256xf32>
    %143 = arith.addf %137, %142 : vector<2x16x256xf32>
    %cst_106 = arith.constant 0.000000e+00 : f32
    %144 = vector.broadcast %cst_106 : f32 to vector<2x16x256xf32>
    %145 = arith.maximumf %143, %144 : vector<2x16x256xf32>
    %146 = vector.shape_cast %145 : vector<2x16x256xf32> to vector<32x256xf32>
    %c1_107 = arith.constant 1 : index
    %c0_108 = arith.constant 0 : index
    %c0_109 = arith.constant 0 : index
    %147 = vector.load %arg2[%c1_107, %c0_108, %c0_109] : memref<2x256x256xbf16, #tpu.memory_space<vmem>>, vector<1x256x256xbf16>
    %148 = vector.shape_cast %147 : vector<1x256x256xbf16> to vector<256x256xbf16>
    %149 = arith.truncf %146 : vector<32x256xf32> to vector<32x256xbf16>
    %cst_110 = arith.constant dense<0.000000e+00> : vector<32x256xf32>
    %150 = tpu.matmul %149, %148, %cst_110 {dimension_numbers = #tpu.dot_dimension_numbers<[1], [0], [0], [1], [0, 0, 1, 1], [], []>} : vector<32x256xbf16>, vector<256x256xbf16>, vector<32x256xf32> -> vector<32x256xf32>
    %c1_111 = arith.constant 1 : index
    %c0_112 = arith.constant 0 : index
    %c0_113 = arith.constant 0 : index
    %151 = vector.load %arg3[%c1_111, %c0_112, %c0_113] : memref<2x1x256xf32, #tpu.memory_space<vmem>>, vector<1x1x256xf32>
    %152 = vector.shape_cast %151 : vector<1x1x256xf32> to vector<1x256xf32>
    %153 = vector.broadcast %152 : vector<1x256xf32> to vector<32x256xf32>
    %154 = arith.addf %150, %153 : vector<32x256xf32>
    %155 = vector.shape_cast %154 : vector<32x256xf32> to vector<2x16x256xf32>
    %cst_114 = arith.constant dense<0.000000e+00> : vector<2x256xf32>
    %156 = vector.multi_reduction <add>, %155, %cst_114 [1] : vector<2x16x256xf32> to vector<2x256xf32>
    %157 = vector.shape_cast %156 : vector<2x256xf32> to vector<2x1x256xf32>
    %cst_115 = arith.constant 6.250000e-02 : f32
    %158 = vector.broadcast %cst_115 : f32 to vector<2x1x256xf32>
    %159 = arith.mulf %158, %157 : vector<2x1x256xf32>
    %160 = vector.broadcast %159 : vector<2x1x256xf32> to vector<2x16x256xf32>
    %161 = arith.addf %155, %160 : vector<2x16x256xf32>
    %cst_116 = arith.constant 0.000000e+00 : f32
    %162 = vector.broadcast %cst_116 : f32 to vector<2x16x256xf32>
    %163 = arith.maximumf %161, %162 : vector<2x16x256xf32>
    %164 = vector.shape_cast %163 : vector<2x16x256xf32> to vector<32x256xf32>
    %c0_117 = arith.constant 0 : index
    %c0_118 = arith.constant 0 : index
    %165 = vector.load %arg4[%c0_117, %c0_118] : memref<16x32xf32, #tpu.memory_space<vmem>>, vector<16x32xf32>
    %cst_119 = arith.constant dense<0.000000e+00> : vector<16x256xf32>
    %166 = tpu.matmul %165, %164, %cst_119 {dimension_numbers = #tpu.dot_dimension_numbers<[1], [0], [0], [1], [0, 0, 1, 1], [], []>} : vector<16x32xf32>, vector<32x256xf32>, vector<16x256xf32> -> vector<16x256xf32>
    %167 = vector.extract_strided_slice %166 {offsets = [0, 0], sizes = [8, 256], strides = [1, 1]} : vector<16x256xf32> to vector<8x256xf32>
    %168 = vector.extract_strided_slice %166 {offsets = [8, 0], sizes = [8, 256], strides = [1, 1]} : vector<16x256xf32> to vector<8x256xf32>
    %169 = arith.truncf %167 : vector<8x256xf32> to vector<8x256xbf16>
    %c0_120 = arith.constant 0 : index
    %c0_121 = arith.constant 0 : index
    %170 = vector.load %arg5[%c0_120, %c0_121] : memref<512x128xbf16, #tpu.memory_space<vmem>>, vector<256x128xbf16>
    %cst_122 = arith.constant dense<0.000000e+00> : vector<8x128xf32>
    %171 = tpu.matmul %169, %170, %cst_122 {dimension_numbers = #tpu.dot_dimension_numbers<[1], [0], [0], [1], [0, 0, 1, 1], [], []>} : vector<8x256xbf16>, vector<256x128xbf16>, vector<8x128xf32> -> vector<8x128xf32>
    %172 = arith.truncf %168 : vector<8x256xf32> to vector<8x256xbf16>
    %c256 = arith.constant 256 : index
    %c0_123 = arith.constant 0 : index
    %173 = vector.load %arg5[%c256, %c0_123] : memref<512x128xbf16, #tpu.memory_space<vmem>>, vector<256x128xbf16>
    %cst_124 = arith.constant dense<0.000000e+00> : vector<8x128xf32>
    %174 = tpu.matmul %172, %173, %cst_124 {dimension_numbers = #tpu.dot_dimension_numbers<[1], [0], [0], [1], [0, 0, 1, 1], [], []>} : vector<8x256xbf16>, vector<256x128xbf16>, vector<8x128xf32> -> vector<8x128xf32>
    %175 = arith.addf %171, %174 : vector<8x128xf32>
    %c0_125 = arith.constant 0 : index
    %c0_126 = arith.constant 0 : index
    %176 = vector.load %arg6[%c0_125, %c0_126] : memref<1x128xf32, #tpu.memory_space<vmem>>, vector<1x128xf32>
    %177 = vector.broadcast %176 : vector<1x128xf32> to vector<8x128xf32>
    %178 = arith.addf %175, %177 : vector<8x128xf32>
    %c0_127 = arith.constant 0 : index
    %c0_128 = arith.constant 0 : index
    %179 = vector.load %arg7[%c0_127, %c0_128] : memref<8x128xf32, #tpu.memory_space<vmem>>, vector<8x128xf32>
    tpu.vector_store %arg7[%c0_127, %c0_128], %178 {strides = array<i32>} : memref<8x128xf32, #tpu.memory_space<vmem>>, vector<8x128xf32>,
    return
  }
}

</mosaic_0001>

<llo_original>
// kernel: forward.1
$region0: #{forward.1}
  #allocation0 [shape = 'u32[]', space=smem, size = 0x4, offset = 0x4, fixed_abs, tag = 'smem constant byte address 0x4 - core index']
  #allocation1 [shape = 'u32[144,128]{1,0:T(1,128)}', space=vmem, size = 0x12000, scoped, tag = 'internal scratch']
  #allocation2 [shape = 'f32[32,256]{1,0:T(8,128)}', space=vmem, size = 0x8000, scoped, tag = 'scratch operand']
  %s0 = inlined_call_operand.vmem [shape: s32[32], index: 0, kind: input, shape index: {}]
  %s1 = inlined_call_operand.vmem [shape: f32[50,256], index: 1, kind: input, shape index: {}]
  %s2 = inlined_call_operand.vmem [shape: bf16[2,256,256], index: 2, kind: input, shape index: {}]
  %s3 = inlined_call_operand.vmem [shape: f32[2,1,256], index: 3, kind: input, shape index: {}]
  %s4 = inlined_call_operand.vmem [shape: f32[16,32], index: 4, kind: input, shape index: {}]
  %s5 = inlined_call_operand.vmem [shape: bf16[512,128], index: 5, kind: input, shape index: {}]
  %s6 = inlined_call_operand.vmem [shape: f32[1,128], index: 6, kind: input, shape index: {}]
  %s7 = inlined_call_operand.vmem [shape: f32[8,128], index: 7, kind: output, shape index: {}]
  %s8 = sld [smem:[#allocation0]]
  $region42: #{forward.1} parent=0
    _
  %s10 = ssub.s32 1, %s8
  %s11 = scalar_select 0, %s10, %s8
  $region1: #{forward.1} parent=0
    #allocation3 [shape = 'u8[512]{0}', space=smem, size = 0x200, scoped, tag = 'input window, operand 0, single buffered']
    #allocation4 [shape = 's32[1]{0}', space=sflag, size = 0x4, scoped, tag = 'scoped memory for forward.1']
    %12 = vsyncpa [#allocation4], 0
    // Predicated region
    $region2: #{forward.1} parent=1 // pred_check
      _
    $region3: #{forward.1} parent=1 // pred_check_branch
      %14 = sbr.rel (0) target = $region5
    $region4: #{forward.1} parent=1 // pred_region
      %s16 = ssub.s32 16, 16
      %17 = vsyncadd [#allocation4], %s16
      %s19 = sshll.u32 %s0, 4
      %s20 = int_to_ptr.vmem [resolvable:$true] %s19
      %22 = dma.vmem_to_smem %s20, 16, [#allocation3], [#allocation4]
    $region5: #{forward.1} parent=1 // pred_fallthru
      _
    // Predicated region
    $region6: #{forward.1} parent=1 // pred_check
      _
    $region7: #{forward.1} parent=1 // pred_check_branch
      %24 = sbr.rel (0) target = $region9
    $region8: #{forward.1} parent=1 // pred_region
      _
    $region9: #{forward.1} parent=1 // pred_fallthru
      _
    // Predicated region
    $region10: #{forward.1} parent=1 // pred_check
      _
    $region11: #{forward.1} parent=1 // pred_check_branch
      %26 = sbr.rel (0) target = $region13
    $region12: #{forward.1} parent=1 // pred_region
      _
    $region13: #{forward.1} parent=1 // pred_fallthru
      _
    // Predicated region
    $region14: #{forward.1} parent=1 // pred_check
      _
    $region15: #{forward.1} parent=1 // pred_check_branch
      %28 = sbr.rel (0) target = $region17
    $region16: #{forward.1} parent=1 // pred_region
      _
    $region17: #{forward.1} parent=1 // pred_fallthru
      _
    // Predicated region
    $region18: #{forward.1} parent=1 // pred_check
      _
    $region19: #{forward.1} parent=1 // pred_check_branch
      %30 = sbr.rel (0) target = $region21
    $region20: #{forward.1} parent=1 // pred_region
      _
    $region21: #{forward.1} parent=1 // pred_fallthru
      _
    // Predicated region
    $region22: #{forward.1} parent=1 // pred_check
      _
    $region23: #{forward.1} parent=1 // pred_check_branch
      %32 = sbr.rel (0) target = $region25
    $region24: #{forward.1} parent=1 // pred_region
      _
    $region25: #{forward.1} parent=1 // pred_fallthru
      _
    // Predicated region
    $region26: #{forward.1} parent=1 // pred_check
      _
    $region27: #{forward.1} parent=1 // pred_check_branch
      %34 = sbr.rel (0) target = $region29
    $region28: #{forward.1} parent=1 // pred_region
      _
    $region29: #{forward.1} parent=1 // pred_fallthru
      _
    // Predicated region
    $region30: #{forward.1} parent=1 // pred_check
      _
    $region31: #{forward.1} parent=1 // pred_check_branch
      %36 = sbr.rel (0) target = $region33
    $region32: #{forward.1} parent=1 // pred_region
      %37 = dma.done [#allocation4], 16
    $region33: #{forward.1} parent=1 // pred_fallthru
      _
    %38 = sfence
    %s40 = sld [smem:[#allocation3]]
    %s41 = sshra.s32 %s40, 3
    %s42 = sand.u32 %s40, 7
    %s43 = sshra.s32 %s40, 3
    %s44 = sand.u32 %s40, 7
    %s45 = smul.u32 %s41, 2
    %s46 = smul.u32 %s45, 8
    %s47 = sadd.s32 %s46, %s44
    %s48 = scalar_lea.vmem %s1, %s47
    %v49 = vld [vmem:[%s48] ss:$8 sm:$0x3]
    %v50 = vlaneseq
    %vm51 = vcmp.ge.s32.totalorder %v50, 0
    %vm52 = vcmp.lt.s32.totalorder %v50, 256
    %vm53 = vmand %vm51, %vm52
    %54 = vst.msk [vmem:[#allocation2] ss:$8 sm:$0x3] %vm53, %v49
    %55 = vst.msk [vmem:[#allocation2] ss:$8 sm:$0x0] %vm53, %v49
    %s56 = sld [smem:[#allocation3 + $0x1]]
    %s57 = sshra.s32 %s56, 3
    %s58 = sand.u32 %s56, 7
    %s59 = sshra.s32 %s56, 3
    %s60 = sand.u32 %s56, 7
    %s61 = smul.u32 %s57, 2
    %s62 = smul.u32 %s61, 8
    %s63 = sadd.s32 %s62, %s60
    %s64 = scalar_lea.vmem %s1, %s63
    %v65 = vld [vmem:[%s64] ss:$8 sm:$0x3]
    %s66 = scalar_lea.vmem [#allocation2], 1
    %67 = vst.msk [vmem:[%s66] ss:$8 sm:$0x3] %vm53, %v65
    %68 = vst.msk [vmem:[%s66] ss:$8 sm:$0x0] %vm53, %v65
    %s69 = sld [smem:[#allocation3 + $0x2]]
    %s70 = sshra.s32 %s69, 3
    %s71 = sand.u32 %s69, 7
    %s72 = sshra.s32 %s69, 3
    %s73 = sand.u32 %s69, 7
    %s74 = smul.u32 %s70, 2
    %s75 = smul.u32 %s74, 8
    %s76 = sadd.s32 %s75, %s73
    %s77 = scalar_lea.vmem %s1, %s76
    %v78 = vld [vmem:[%s77] ss:$8 sm:$0x3]
    %s79 = scalar_lea.vmem [#allocation2], 2
    %80 = vst.msk [vmem:[%s79] ss:$8 sm:$0x3] %vm53, %v78
    %81 = vst.msk [vmem:[%s79] ss:$8 sm:$0x0] %vm53, %v78
    %s82 = sld [smem:[#allocation3 + $0x3]]
    %s83 = sshra.s32 %s82, 3
    %s84 = sand.u32 %s82, 7
    %s85 = sshra.s32 %s82, 3
    %s86 = sand.u32 %s82, 7
    %s87 = smul.u32 %s83, 2
    %s88 = smul.u32 %s87, 8
    %s89 = sadd.s32 %s88, %s86
    %s90 = scalar_lea.vmem %s1, %s89
    %v91 = vld [vmem:[%s90] ss:$8 sm:$0x3]
    %s92 = scalar_lea.vmem [#allocation2], 3
    %93 = vst.msk [vmem:[%s92] ss:$8 sm:$0x3] %vm53, %v91
    %94 = vst.msk [vmem:[%s92] ss:$8 sm:$0x0] %vm53, %v91
    %s95 = sld [smem:[#allocation3 + $0x4]]
    %s96 = sshra.s32 %s95, 3
    %s97 = sand.u32 %s95, 7
    %s98 = sshra.s32 %s95, 3
    %s99 = sand.u32 %s95, 7
    %s100 = smul.u32 %s96, 2
    %s101 = smul.u32 %s100, 8
    %s102 = sadd.s32 %s101, %s99
    %s103 = scalar_lea.vmem %s1, %s102
    %v104 = vld [vmem:[%s103] ss:$8 sm:$0x3]
    %s105 = scalar_lea.vmem [#allocation2], 4
    %106 = vst.msk [vmem:[%s105] ss:$8 sm:$0x3] %vm53, %v104
    %107 = vst.msk [vmem:[%s105] ss:$8 sm:$0x0] %vm53, %v104
    %s108 = sld [smem:[#allocation3 + $0x5]]
    %s109 = sshra.s32 %s108, 3
    %s110 = sand.u32 %s108, 7
    %s111 = sshra.s32 %s108, 3
    %s112 = sand.u32 %s108, 7
    %s113 = smul.u32 %s109, 2
    %s114 = smul.u32 %s113, 8
    %s115 = sadd.s32 %s114, %s112
    %s116 = scalar_lea.vmem %s1, %s115
    %v117 = vld [vmem:[%s116] ss:$8 sm:$0x3]
    %s118 = scalar_lea.vmem [#allocation2], 5
    %119 = vst.msk [vmem:[%s118] ss:$8 sm:$0x3] %vm53, %v117
    %120 = vst.msk [vmem:[%s118] ss:$8 sm:$0x0] %vm53, %v117
    %s121 = sld [smem:[#allocation3 + $0x6]]
    %s122 = sshra.s32 %s121, 3
    %s123 = sand.u32 %s121, 7
    %s124 = sshra.s32 %s121, 3
    %s125 = sand.u32 %s121, 7
    %s126 = smul.u32 %s122, 2
    %s127 = smul.u32 %s126, 8
    %s128 = sadd.s32 %s127, %s125
    %s129 = scalar_lea.vmem %s1, %s128
    %v130 = vld [vmem:[%s129] ss:$8 sm:$0x3]
    %s131 = scalar_lea.vmem [#allocation2], 6
    %132 = vst.msk [vmem:[%s131] ss:$8 sm:$0x3] %vm53, %v130
    %133 = vst.msk [vmem:[%s131] ss:$8 sm:$0x0] %vm53, %v130
    %s134 = sld [smem:[#allocation3 + $0x7]]
    %s135 = sshra.s32 %s134, 3
    %s136 = sand.u32 %s134, 7
    %s137 = sshra.s32 %s134, 3
    %s138 = sand.u32 %s134, 7
    %s139 = smul.u32 %s135, 2
    %s140 = smul.u32 %s139, 8
    %s141 = sadd.s32 %s140, %s138
    %s142 = scalar_lea.vmem %s1, %s141
    %v143 = vld [vmem:[%s142] ss:$8 sm:$0x3]
    %s144 = scalar_lea.vmem [#allocation2], 7
    %145 = vst.msk [vmem:[%s144] ss:$8 sm:$0x3] %vm53, %v143
    %146 = vst.msk [vmem:[%s144] ss:$8 sm:$0x0] %vm53, %v143
    %s147 = sld [smem:[#allocation3 + $0x8]]
    %s148 = sshra.s32 %s147, 3
    %s149 = sand.u32 %s147, 7
    %s150 = sshra.s32 %s147, 3
    %s151 = sand.u32 %s147, 7
    %s152 = smul.u32 %s148, 2
    %s153 = smul.u32 %s152, 8
    %s154 = sadd.s32 %s153, %s151
    %s155 = scalar_lea.vmem %s1, %s154
    %v156 = vld [vmem:[%s155] ss:$8 sm:$0x3]
    %s157 = scalar_lea.vmem [#allocation2], 16
    %158 = vst.msk [vmem:[%s157] ss:$8 sm:$0x3] %vm53, %v156
    %159 = vst.msk [vmem:[%s157] ss:$8 sm:$0x0] %vm53, %v156
    %s160 = sld [smem:[#allocation3 + $0x9]]
    %s161 = sshra.s32 %s160, 3
    %s162 = sand.u32 %s160, 7
    %s163 = sshra.s32 %s160, 3
    %s164 = sand.u32 %s160, 7
    %s165 = smul.u32 %s161, 2
    %s166 = smul.u32 %s165, 8
    %s167 = sadd.s32 %s166, %s164
    %s168 = scalar_lea.vmem %s1, %s167
    %v169 = vld [vmem:[%s168] ss:$8 sm:$0x3]
    %s170 = scalar_lea.vmem [#allocation2], 17
    %171 = vst.msk [vmem:[%s170] ss:$8 sm:$0x3] %vm53, %v169
    %172 = vst.msk [vmem:[%s170] ss:$8 sm:$0x0] %vm53, %v169
    %s173 = sld [smem:[#allocation3 + $0xa]]
    %s174 = sshra.s32 %s173, 3
    %s175 = sand.u32 %s173, 7
    %s176 = sshra.s32 %s173, 3
    %s177 = sand.u32 %s173, 7
    %s178 = smul.u32 %s174, 2
    %s179 = smul.u32 %s178, 8
    %s180 = sadd.s32 %s179, %s177
    %s181 = scalar_lea.vmem %s1, %s180
    %v182 = vld [vmem:[%s181] ss:$8 sm:$0x3]
    %s183 = scalar_lea.vmem [#allocation2], 18
    %184 = vst.msk [vmem:[%s183] ss:$8 sm:$0x3] %vm53, %v182
    %185 = vst.msk [vmem:[%s183] ss:$8 sm:$0x0] %vm53, %v182
    %s186 = sld [smem:[#allocation3 + $0xb]]
    %s187 = sshra.s32 %s186, 3
    %s188 = sand.u32 %s186, 7
    %s189 = sshra.s32 %s186, 3
    %s190 = sand.u32 %s186, 7
    %s191 = smul.u32 %s187, 2
    %s192 = smul.u32 %s191, 8
    %s193 = sadd.s32 %s192, %s190
    %s194 = scalar_lea.vmem %s1, %s193
    %v195 = vld [vmem:[%s194] ss:$8 sm:$0x3]
    %s196 = scalar_lea.vmem [#allocation2], 19
    %197 = vst.msk [vmem:[%s196] ss:$8 sm:$0x3] %vm53, %v195
    %198 = vst.msk [vmem:[%s196] ss:$8 sm:$0x0] %vm53, %v195
    %s199 = sld [smem:[#allocation3 + $0xc]]
    %s200 = sshra.s32 %s199, 3
    %s201 = sand.u32 %s199, 7
    %s202 = sshra.s32 %s199, 3
    %s203 = sand.u32 %s199, 7
    %s204 = smul.u32 %s200, 2
    %s205 = smul.u32 %s204, 8
    %s206 = sadd.s32 %s205, %s203
    %s207 = scalar_lea.vmem %s1, %s206
    %v208 = vld [vmem:[%s207] ss:$8 sm:$0x3]
    %s209 = scalar_lea.vmem [#allocation2], 20
    %210 = vst.msk [vmem:[%s209] ss:$8 sm:$0x3] %vm53, %v208
    %211 = vst.msk [vmem:[%s209] ss:$8 sm:$0x0] %vm53, %v208
    %s212 = sld [smem:[#allocation3 + $0xd]]
    %s213 = sshra.s32 %s212, 3
    %s214 = sand.u32 %s212, 7
    %s215 = sshra.s32 %s212, 3
    %s216 = sand.u32 %s212, 7
    %s217 = smul.u32 %s213, 2
    %s218 = smul.u32 %s217, 8
    %s219 = sadd.s32 %s218, %s216
    %s220 = scalar_lea.vmem %s1, %s219
    %v221 = vld [vmem:[%s220] ss:$8 sm:$0x3]
    %s222 = scalar_lea.vmem [#allocation2], 21
    %223 = vst.msk [vmem:[%s222] ss:$8 sm:$0x3] %vm53, %v221
    %224 = vst.msk [vmem:[%s222] ss:$8 sm:$0x0] %vm53, %v221
    %s225 = sld [smem:[#allocation3 + $0xe]]
    %s226 = sshra.s32 %s225, 3
    %s227 = sand.u32 %s225, 7
    %s228 = sshra.s32 %s225, 3
    %s229 = sand.u32 %s225, 7
    %s230 = smul.u32 %s226, 2
    %s231 = smul.u32 %s230, 8
    %s232 = sadd.s32 %s231, %s229
    %s233 = scalar_lea.vmem %s1, %s232
    %v234 = vld [vmem:[%s233] ss:$8 sm:$0x3]
    %s235 = scalar_lea.vmem [#allocation2], 22
    %236 = vst.msk [vmem:[%s235] ss:$8 sm:$0x3] %vm53, %v234
    %237 = vst.msk [vmem:[%s235] ss:$8 sm:$0x0] %vm53, %v234
    %s238 = sld [smem:[#allocation3 + $0xf]]
    %s239 = sshra.s32 %s238, 3
    %s240 = sand.u32 %s238, 7
    %s241 = sshra.s32 %s238, 3
    %s242 = sand.u32 %s238, 7
    %s243 = smul.u32 %s239, 2
    %s244 = smul.u32 %s243, 8
    %s245 = sadd.s32 %s244, %s242
    %s246 = scalar_lea.vmem %s1, %s245
    %v247 = vld [vmem:[%s246] ss:$8 sm:$0x3]
    %s248 = scalar_lea.vmem [#allocation2], 23
    %249 = vst.msk [vmem:[%s248] ss:$8 sm:$0x3] %vm53, %v247
    %250 = vst.msk [vmem:[%s248] ss:$8 sm:$0x0] %vm53, %v247
    %s251 = sld [smem:[#allocation3 + $0x10]]
    %s252 = sshra.s32 %s251, 3
    %s253 = sand.u32 %s251, 7
    %s254 = sshra.s32 %s251, 3
    %s255 = sand.u32 %s251, 7
    %s256 = smul.u32 %s252, 2
    %s257 = smul.u32 %s256, 8
    %s258 = sadd.s32 %s257, %s255
    %s259 = scalar_lea.vmem %s1, %s258
    %v260 = vld [vmem:[%s259] ss:$8 sm:$0x3]
    %s261 = scalar_lea.vmem [#allocation2], 32
    %262 = vst.msk [vmem:[%s261] ss:$8 sm:$0x3] %vm53, %v260
    %263 = vst.msk [vmem:[%s261] ss:$8 sm:$0x0] %vm53, %v260
    %s264 = sld [smem:[#allocation3 + $0x11]]
    %s265 = sshra.s32 %s264, 3
    %s266 = sand.u32 %s264, 7
    %s267 = sshra.s32 %s264, 3
    %s268 = sand.u32 %s264, 7
    %s269 = smul.u32 %s265, 2
    %s270 = smul.u32 %s269, 8
    %s271 = sadd.s32 %s270, %s268
    %s272 = scalar_lea.vmem %s1, %s271
    %v273 = vld [vmem:[%s272] ss:$8 sm:$0x3]
    %s274 = scalar_lea.vmem [#allocation2], 33
    %275 = vst.msk [vmem:[%s274] ss:$8 sm:$0x3] %vm53, %v273
    %276 = vst.msk [vmem:[%s274] ss:$8 sm:$0x0] %vm53, %v273
    %s277 = sld [smem:[#allocation3 + $0x12]]
    %s278 = sshra.s32 %s277, 3
    %s279 = sand.u32 %s277, 7
    %s280 = sshra.s32 %s277, 3
    %s281 = sand.u32 %s277, 7
    %s282 = smul.u32 %s278, 2
    %s283 = smul.u32 %s282, 8
    %s284 = sadd.s32 %s283, %s281
    %s285 = scalar_lea.vmem %s1, %s284
    %v286 = vld [vmem:[%s285] ss:$8 sm:$0x3]
    %s287 = scalar_lea.vmem [#allocation2], 34
    %288 = vst.msk [vmem:[%s287] ss:$8 sm:$0x3] %vm53, %v286
    %289 = vst.msk [vmem:[%s287] ss:$8 sm:$0x0] %vm53, %v286
    %s290 = sld [smem:[#allocation3 + $0x13]]
    %s291 = sshra.s32 %s290, 3
    %s292 = sand.u32 %s290, 7
    %s293 = sshra.s32 %s290, 3
    %s294 = sand.u32 %s290, 7
    %s295 = smul.u32 %s291, 2
    %s296 = smul.u32 %s295, 8
    %s297 = sadd.s32 %s296, %s294
    %s298 = scalar_lea.vmem %s1, %s297
    %v299 = vld [vmem:[%s298] ss:$8 sm:$0x3]
    %s300 = scalar_lea.vmem [#allocation2], 35
    %301 = vst.msk [vmem:[%s300] ss:$8 sm:$0x3] %vm53, %v299
    %302 = vst.msk [vmem:[%s300] ss:$8 sm:$0x0] %vm53, %v299
    %s303 = sld [smem:[#allocation3 + $0x14]]
    %s304 = sshra.s32 %s303, 3
    %s305 = sand.u32 %s303, 7
    %s306 = sshra.s32 %s303, 3
    %s307 = sand.u32 %s303, 7
    %s308 = smul.u32 %s304, 2
    %s309 = smul.u32 %s308, 8
    %s310 = sadd.s32 %s309, %s307
    %s311 = scalar_lea.vmem %s1, %s310
    %v312 = vld [vmem:[%s311] ss:$8 sm:$0x3]
    %s313 = scalar_lea.vmem [#allocation2], 36
    %314 = vst.msk [vmem:[%s313] ss:$8 sm:$0x3] %vm53, %v312
    %315 = vst.msk [vmem:[%s313] ss:$8 sm:$0x0] %vm53, %v312
    %s316 = sld [smem:[#allocation3 + $0x15]]
    %s317 = sshra.s32 %s316, 3
    %s318 = sand.u32 %s316, 7
    %s319 = sshra.s32 %s316, 3
    %s320 = sand.u32 %s316, 7
    %s321 = smul.u32 %s317, 2
    %s322 = smul.u32 %s321, 8
    %s323 = sadd.s32 %s322, %s320
    %s324 = scalar_lea.vmem %s1, %s323
    %v325 = vld [vmem:[%s324] ss:$8 sm:$0x3]
    %s326 = scalar_lea.vmem [#allocation2], 37
    %327 = vst.msk [vmem:[%s326] ss:$8 sm:$0x3] %vm53, %v325
    %328 = vst.msk [vmem:[%s326] ss:$8 sm:$0x0] %vm53, %v325
    %s329 = sld [smem:[#allocation3 + $0x16]]
    %s330 = sshra.s32 %s329, 3
    %s331 = sand.u32 %s329, 7
    %s332 = sshra.s32 %s329, 3
    %s333 = sand.u32 %s329, 7
    %s334 = smul.u32 %s330, 2
    %s335 = smul.u32 %s334, 8
    %s336 = sadd.s32 %s335, %s333
    %s337 = scalar_lea.vmem %s1, %s336
    %v338 = vld [vmem:[%s337] ss:$8 sm:$0x3]
    %s339 = scalar_lea.vmem [#allocation2], 38
    %340 = vst.msk [vmem:[%s339] ss:$8 sm:$0x3] %vm53, %v338
    %341 = vst.msk [vmem:[%s339] ss:$8 sm:$0x0] %vm53, %v338
    %s342 = sld [smem:[#allocation3 + $0x17]]
    %s343 = sshra.s32 %s342, 3
    %s344 = sand.u32 %s342, 7
    %s345 = sshra.s32 %s342, 3
    %s346 = sand.u32 %s342, 7
    %s347 = smul.u32 %s343, 2
    %s348 = smul.u32 %s347, 8
    %s349 = sadd.s32 %s348, %s346
    %s350 = scalar_lea.vmem %s1, %s349
    %v351 = vld [vmem:[%s350] ss:$8 sm:$0x3]
    %s352 = scalar_lea.vmem [#allocation2], 39
    %353 = vst.msk [vmem:[%s352] ss:$8 sm:$0x3] %vm53, %v351
    %354 = vst.msk [vmem:[%s352] ss:$8 sm:$0x0] %vm53, %v351
    %s355 = sld [smem:[#allocation3 + $0x18]]
    %s356 = sshra.s32 %s355, 3
    %s357 = sand.u32 %s355, 7
    %s358 = sshra.s32 %s355, 3
    %s359 = sand.u32 %s355, 7
    %s360 = smul.u32 %s356, 2
    %s361 = smul.u32 %s360, 8
    %s362 = sadd.s32 %s361, %s359
    %s363 = scalar_lea.vmem %s1, %s362
    %v364 = vld [vmem:[%s363] ss:$8 sm:$0x3]
    %s365 = scalar_lea.vmem [#allocation2], 48
    %366 = vst.msk [vmem:[%s365] ss:$8 sm:$0x3] %vm53, %v364
    %367 = vst.msk [vmem:[%s365] ss:$8 sm:$0x0] %vm53, %v364
    %s368 = sld [smem:[#allocation3 + $0x19]]
    %s369 = sshra.s32 %s368, 3
    %s370 = sand.u32 %s368, 7
    %s371 = sshra.s32 %s368, 3
    %s372 = sand.u32 %s368, 7
    %s373 = smul.u32 %s369, 2
    %s374 = smul.u32 %s373, 8
    %s375 = sadd.s32 %s374, %s372
    %s376 = scalar_lea.vmem %s1, %s375
    %v377 = vld [vmem:[%s376] ss:$8 sm:$0x3]
    %s378 = scalar_lea.vmem [#allocation2], 49
    %379 = vst.msk [vmem:[%s378] ss:$8 sm:$0x3] %vm53, %v377
    %380 = vst.msk [vmem:[%s378] ss:$8 sm:$0x0] %vm53, %v377
    %s381 = sld [smem:[#allocation3 + $0x1a]]
    %s382 = sshra.s32 %s381, 3
    %s383 = sand.u32 %s381, 7
    %s384 = sshra.s32 %s381, 3
    %s385 = sand.u32 %s381, 7
    %s386 = smul.u32 %s382, 2
    %s387 = smul.u32 %s386, 8
    %s388 = sadd.s32 %s387, %s385
    %s389 = scalar_lea.vmem %s1, %s388
    %v390 = vld [vmem:[%s389] ss:$8 sm:$0x3]
    %s391 = scalar_lea.vmem [#allocation2], 50
    %392 = vst.msk [vmem:[%s391] ss:$8 sm:$0x3] %vm53, %v390
    %393 = vst.msk [vmem:[%s391] ss:$8 sm:$0x0] %vm53, %v390
    %s394 = sld [smem:[#allocation3 + $0x1b]]
    %s395 = sshra.s32 %s394, 3
    %s396 = sand.u32 %s394, 7
    %s397 = sshra.s32 %s394, 3
    %s398 = sand.u32 %s394, 7
    %s399 = smul.u32 %s395, 2
    %s400 = smul.u32 %s399, 8
    %s401 = sadd.s32 %s400, %s398
    %s402 = scalar_lea.vmem %s1, %s401
    %v403 = vld [vmem:[%s402] ss:$8 sm:$0x3]
    %s404 = scalar_lea.vmem [#allocation2], 51
    %405 = vst.msk [vmem:[%s404] ss:$8 sm:$0x3] %vm53, %v403
    %406 = vst.msk [vmem:[%s404] ss:$8 sm:$0x0] %vm53, %v403
    %s407 = sld [smem:[#allocation3 + $0x1c]]
    %s408 = sshra.s32 %s407, 3
    %s409 = sand.u32 %s407, 7
    %s410 = sshra.s32 %s407, 3
    %s411 = sand.u32 %s407, 7
    %s412 = smul.u32 %s408, 2
    %s413 = smul.u32 %s412, 8
    %s414 = sadd.s32 %s413, %s411
    %s415 = scalar_lea.vmem %s1, %s414
    %v416 = vld [vmem:[%s415] ss:$8 sm:$0x3]
    %s417 = scalar_lea.vmem [#allocation2], 52
    %418 = vst.msk [vmem:[%s417] ss:$8 sm:$0x3] %vm53, %v416
    %419 = vst.msk [vmem:[%s417] ss:$8 sm:$0x0] %vm53, %v416
    %s420 = sld [smem:[#allocation3 + $0x1d]]
    %s421 = sshra.s32 %s420, 3
    %s422 = sand.u32 %s420, 7
    %s423 = sshra.s32 %s420, 3
    %s424 = sand.u32 %s420, 7
    %s425 = smul.u32 %s421, 2
    %s426 = smul.u32 %s425, 8
    %s427 = sadd.s32 %s426, %s424
    %s428 = scalar_lea.vmem %s1, %s427
    %v429 = vld [vmem:[%s428] ss:$8 sm:$0x3]
    %s430 = scalar_lea.vmem [#allocation2], 53
    %431 = vst.msk [vmem:[%s430] ss:$8 sm:$0x3] %vm53, %v429
    %432 = vst.msk [vmem:[%s430] ss:$8 sm:$0x0] %vm53, %v429
    %s433 = sld [smem:[#allocation3 + $0x1e]]
    %s434 = sshra.s32 %s433, 3
    %s435 = sand.u32 %s433, 7
    %s436 = sshra.s32 %s433, 3
    %s437 = sand.u32 %s433, 7
    %s438 = smul.u32 %s434, 2
    %s439 = smul.u32 %s438, 8
    %s440 = sadd.s32 %s439, %s437
    %s441 = scalar_lea.vmem %s1, %s440
    %v442 = vld [vmem:[%s441] ss:$8 sm:$0x3]
    %s443 = scalar_lea.vmem [#allocation2], 54
    %444 = vst.msk [vmem:[%s443] ss:$8 sm:$0x3] %vm53, %v442
    %445 = vst.msk [vmem:[%s443] ss:$8 sm:$0x0] %vm53, %v442
    %s446 = sld [smem:[#allocation3 + $0x1f]]
    %s447 = sshra.s32 %s446, 3
    %s448 = sand.u32 %s446, 7
    %s449 = sshra.s32 %s446, 3
    %s450 = sand.u32 %s446, 7
    %s451 = smul.u32 %s447, 2
    %s452 = smul.u32 %s451, 8
    %s453 = sadd.s32 %s452, %s450
    %s454 = scalar_lea.vmem %s1, %s453
    %v455 = vld [vmem:[%s454] ss:$8 sm:$0x3]
    %s456 = scalar_lea.vmem [#allocation2], 55
    %457 = vst.msk [vmem:[%s456] ss:$8 sm:$0x3] %vm53, %v455
    %458 = vst.msk [vmem:[%s456] ss:$8 sm:$0x0] %vm53, %v455
    %v459 = vld [vmem:[#allocation2] sm:$0xff]
    %v460 = vld [vmem:[#allocation2 + $0x8] sm:$0xff]
    %v461 = vld [vmem:[#allocation2 + $0x10] sm:$0xff]
    %v462 = vld [vmem:[#allocation2 + $0x18] sm:$0xff]
    %v463 = vld [vmem:[#allocation2 + $0x20] sm:$0xff]
    %v464 = vld [vmem:[#allocation2 + $0x28] sm:$0xff]
    %v465 = vld [vmem:[#allocation2 + $0x30] sm:$0xff]
    %v466 = vld [vmem:[#allocation2 + $0x38] sm:$0xff]
    %v467 = vld [vmem:[%s2] sm:$0xff]
    %v468 = vld [vmem:[%s2 + $0x8] sm:$0xff]
    %v469 = vld [vmem:[%s2 + $0x10] sm:$0xff]
    %v470 = vld [vmem:[%s2 + $0x18] sm:$0xff]
    %v471 = vld [vmem:[%s2 + $0x20] sm:$0xff]
    %v472 = vld [vmem:[%s2 + $0x28] sm:$0xff]
    %v473 = vld [vmem:[%s2 + $0x30] sm:$0xff]
    %v474 = vld [vmem:[%s2 + $0x38] sm:$0xff]
    %v475 = vld [vmem:[%s2 + $0x40] sm:$0xff]
    %v476 = vld [vmem:[%s2 + $0x48] sm:$0xff]
    %v477 = vld [vmem:[%s2 + $0x50] sm:$0xff]
    %v478 = vld [vmem:[%s2 + $0x58] sm:$0xff]
    %v479 = vld [vmem:[%s2 + $0x60] sm:$0xff]
    %v480 = vld [vmem:[%s2 + $0x68] sm:$0xff]
    %v481 = vld [vmem:[%s2 + $0x70] sm:$0xff]
    %v482 = vld [vmem:[%s2 + $0x78] sm:$0xff]
    %v483 = vld [vmem:[%s2 + $0x80] sm:$0xff]
    %v484 = vld [vmem:[%s2 + $0x88] sm:$0xff]
    %v485 = vld [vmem:[%s2 + $0x90] sm:$0xff]
    %v486 = vld [vmem:[%s2 + $0x98] sm:$0xff]
    %v487 = vld [vmem:[%s2 + $0xa0] sm:$0xff]
    %v488 = vld [vmem:[%s2 + $0xa8] sm:$0xff]
    %v489 = vld [vmem:[%s2 + $0xb0] sm:$0xff]
    %v490 = vld [vmem:[%s2 + $0xb8] sm:$0xff]
    %v491 = vld [vmem:[%s2 + $0xc0] sm:$0xff]
    %v492 = vld [vmem:[%s2 + $0xc8] sm:$0xff]
    %v493 = vld [vmem:[%s2 + $0xd0] sm:$0xff]
    %v494 = vld [vmem:[%s2 + $0xd8] sm:$0xff]
    %v495 = vld [vmem:[%s2 + $0xe0] sm:$0xff]
    %v496 = vld [vmem:[%s2 + $0xe8] sm:$0xff]
    %v497 = vld [vmem:[%s2 + $0xf0] sm:$0xff]
    %v498 = vld [vmem:[%s2 + $0xf8] sm:$0xff]
    %v499 = vpack.c.bf16 %v461, %v459
    %v500 = vpack.c.bf16 %v462, %v460
    %v501 = vpack.c.bf16 %v465, %v463
    %v502 = vpack.c.bf16 %v466, %v464
    %v503 = vld [vmem:[%s3] sm:$0x3]
    %v505 = vlaneseq
    %v506 = vshrl.u32 %v505, 7
    %v507 = vsub.s32 0, %v506
    %v508 = vrot.slane %v503, %v507
    %v509 = vlaneseq
    %v510 = vshrl.u32 %v509, 7
    %v511 = vsub.s32 1, %v510
    %v512 = vrot.slane %v503, %v511
    %v547 = vunpack.c.l.b16 %v467
    %v548 = vunpack.c.h.b16 %v467
    %v549 = vunpack.c.l.b16 %v468
    %v550 = vunpack.c.h.b16 %v468
    %v551 = vunpack.c.l.b16 %v469
    %v552 = vunpack.c.h.b16 %v469
    %v553 = vunpack.c.l.b16 %v470
    %v554 = vunpack.c.h.b16 %v470
    %v555 = vunpack.c.l.b16 %v471
    %v556 = vunpack.c.h.b16 %v471
    %v557 = vunpack.c.l.b16 %v472
    %v558 = vunpack.c.h.b16 %v472
    %v559 = vunpack.c.l.b16 %v473
    %v560 = vunpack.c.h.b16 %v473
    %v561 = vunpack.c.l.b16 %v474
    %v562 = vunpack.c.h.b16 %v474
    %v563 = vunpack.c.l.b16 %v475
    %v564 = vunpack.c.h.b16 %v475
    %v565 = vunpack.c.l.b16 %v476
    %v566 = vunpack.c.h.b16 %v476
    %v567 = vunpack.c.l.b16 %v477
    %v568 = vunpack.c.h.b16 %v477
    %v569 = vunpack.c.l.b16 %v478
    %v570 = vunpack.c.h.b16 %v478
    %v571 = vunpack.c.l.b16 %v479
    %v572 = vunpack.c.h.b16 %v479
    %v573 = vunpack.c.l.b16 %v480
    %v574 = vunpack.c.h.b16 %v480
    %v575 = vunpack.c.l.b16 %v481
    %v576 = vunpack.c.h.b16 %v481
    %v577 = vunpack.c.l.b16 %v482
    %v578 = vunpack.c.h.b16 %v482
    %v579 = vunpack.c.l.b16 %v483
    %v580 = vunpack.c.h.b16 %v483
    %v581 = vunpack.c.l.b16 %v484
    %v582 = vunpack.c.h.b16 %v484
    %v583 = vunpack.c.l.b16 %v485
    %v584 = vunpack.c.h.b16 %v485
    %v585 = vunpack.c.l.b16 %v486
    %v586 = vunpack.c.h.b16 %v486
    %v587 = vunpack.c.l.b16 %v487
    %v588 = vunpack.c.h.b16 %v487
    %v589 = vunpack.c.l.b16 %v488
    %v590 = vunpack.c.h.b16 %v488
    %v591 = vunpack.c.l.b16 %v489
    %v592 = vunpack.c.h.b16 %v489
    %v593 = vunpack.c.l.b16 %v490
    %v594 = vunpack.c.h.b16 %v490
    %v595 = vunpack.c.l.b16 %v491
    %v596 = vunpack.c.h.b16 %v491
    %v597 = vunpack.c.l.b16 %v492
    %v598 = vunpack.c.h.b16 %v492
    %v599 = vunpack.c.l.b16 %v493
    %v600 = vunpack.c.h.b16 %v493
    %v601 = vunpack.c.l.b16 %v494
    %v602 = vunpack.c.h.b16 %v494
    %v603 = vunpack.c.l.b16 %v495
    %v604 = vunpack.c.h.b16 %v495
    %v605 = vunpack.c.l.b16 %v496
    %v606 = vunpack.c.h.b16 %v496
    %v607 = vunpack.c.l.b16 %v497
    %v608 = vunpack.c.h.b16 %v497
    %v609 = vunpack.c.l.b16 %v498
    %v610 = vunpack.c.h.b16 %v498
    %v611 = vpack.c.b16 %v549, %v547
    %v612 = vpack.c.b16 %v550, %v548
    %v613 = vpack.c.b16 %v553, %v551
    %v614 = vpack.c.b16 %v554, %v552
    %v615 = vpack.c.b16 %v557, %v555
    %v616 = vpack.c.b16 %v558, %v556
    %v617 = vpack.c.b16 %v561, %v559
    %v618 = vpack.c.b16 %v562, %v560
    %v619 = vpack.c.b16 %v565, %v563
    %v620 = vpack.c.b16 %v566, %v564
    %v621 = vpack.c.b16 %v569, %v567
    %v622 = vpack.c.b16 %v570, %v568
    %v623 = vpack.c.b16 %v573, %v571
    %v624 = vpack.c.b16 %v574, %v572
    %v625 = vpack.c.b16 %v577, %v575
    %v626 = vpack.c.b16 %v578, %v576
    %v627 = vpack.c.b16 %v581, %v579
    %v628 = vpack.c.b16 %v582, %v580
    %v629 = vpack.c.b16 %v585, %v583
    %v630 = vpack.c.b16 %v586, %v584
    %v631 = vpack.c.b16 %v589, %v587
    %v632 = vpack.c.b16 %v590, %v588
    %v633 = vpack.c.b16 %v593, %v591
    %v634 = vpack.c.b16 %v594, %v592
    %v635 = vpack.c.b16 %v597, %v595
    %v636 = vpack.c.b16 %v598, %v596
    %v637 = vpack.c.b16 %v601, %v599
    %v638 = vpack.c.b16 %v602, %v600
    %v639 = vpack.c.b16 %v605, %v603
    %v640 = vpack.c.b16 %v606, %v604
    %v641 = vpack.c.b16 %v609, %v607
    %v642 = vpack.c.b16 %v610, %v608
    %675 = vmatprep.subr.bf16.mxu0 %v612
    %676 = vmatpush1.bf16.msra.mxu0 %v611
    %677 = vmatprep.subr.bf16.mxu0 %v614
    %678 = vmatpush1.bf16.msra.mxu0 %v613
    %679 = vmatprep.subr.bf16.mxu0 %v616
    %680 = vmatpush1.bf16.msra.mxu0 %v615
    %681 = vmatprep.subr.bf16.mxu0 %v618
    %682 = vmatpush1.bf16.msra.mxu0 %v617
    %683 = vmatprep.subr.bf16.mxu0 %v620
    %684 = vmatpush1.bf16.msra.mxu0 %v619
    %685 = vmatprep.subr.bf16.mxu0 %v622
    %686 = vmatpush1.bf16.msra.mxu0 %v621
    %687 = vmatprep.subr.bf16.mxu0 %v624
    %688 = vmatpush1.bf16.msra.mxu0 %v623
    %689 = vmatprep.subr.bf16.mxu0 %v626
    %690 = vmatpush1.bf16.msra.mxu0 %v625
    %691 = vmatprep.subr.bf16.mxu0 %v628
    %692 = vmatpush1.bf16.msra.mxu0 %v627
    %693 = vmatprep.subr.bf16.mxu0 %v630
    %694 = vmatpush1.bf16.msra.mxu0 %v629
    %695 = vmatprep.subr.bf16.mxu0 %v632
    %696 = vmatpush1.bf16.msra.mxu0 %v631
    %697 = vmatprep.subr.bf16.mxu0 %v634
    %698 = vmatpush1.bf16.msra.mxu0 %v633
    %699 = vmatprep.subr.bf16.mxu0 %v636
    %700 = vmatpush1.bf16.msra.mxu0 %v635
    %701 = vmatprep.subr.bf16.mxu0 %v638
    %702 = vmatpush1.bf16.msra.mxu0 %v637
    %703 = vmatprep.subr.bf16.mxu0 %v640
    %704 = vmatpush1.bf16.msra.mxu0 %v639
    %705 = vmatprep.subr.bf16.mxu0 %v642
    %706 = vmatpush1.bf16.msra.mxu0 %v641
    %707 = vmatprep.mubr.bf16.mxu0 %v500
    %708 = vmatmul.mubr.bf16.gmra.mrb[0].mxu0 %v499
    %v709 = vpop.f32.mrb[0].mxu0
    %v710 = vadd.f32 %v508, %v709
    %v711 = vpop.f32.mrb[0].mxu0
    %v712 = vadd.f32 %v512, %v711
    %v713 = vpop.f32.mrb[0].mxu0
    %v714 = vadd.f32 %v508, %v713
    %v715 = vpop.f32.mrb[0].mxu0
    %v716 = vadd.f32 %v512, %v715
    %717 = vmatprep.mubr.bf16.mxu0 %v502
    %718 = vmatmul.mubr.bf16.gmra.mrb[0].mxu0 %v501
    %v719 = vpop.f32.mrb[0].mxu0
    %v720 = vadd.f32 %v508, %v719
    %v721 = vpop.f32.mrb[0].mxu0
    %v722 = vadd.f32 %v512, %v721
    %v723 = vpop.f32.mrb[0].mxu0
    %v724 = vadd.f32 %v508, %v723
    %v725 = vpop.f32.mrb[0].mxu0
    %v726 = vadd.f32 %v512, %v725
    %727 = vdwg.mxu0
    %v728 = vadd.f32 %v710, %v714
    %v729 = vrot.slane %v728, 4
    %v730 = vadd.f32 %v728, %v729
    %v731 = vrot.slane %v730, 2
    %v732 = vadd.f32 %v730, %v731
    %v733 = vrot.slane %v732, 1
    %v734 = vadd.f32 %v732, %v733
    %v735 = vadd.f32 %v712, %v716
    %v736 = vrot.slane %v735, 4
    %v737 = vadd.f32 %v735, %v736
    %v738 = vrot.slane %v737, 2
    %v739 = vadd.f32 %v737, %v738
    %v740 = vrot.slane %v739, 1
    %v741 = vadd.f32 %v739, %v740
    %v742 = vadd.f32 %v720, %v724
    %v743 = vrot.slane %v742, 4
    %v744 = vadd.f32 %v742, %v743
    %v745 = vrot.slane %v744, 2
    %v746 = vadd.f32 %v744, %v745
    %v747 = vrot.slane %v746, 1
    %v748 = vadd.f32 %v746, %v747
    %v749 = vadd.f32 %v722, %v726
    %v750 = vrot.slane %v749, 4
    %v751 = vadd.f32 %v749, %v750
    %v752 = vrot.slane %v751, 2
    %v753 = vadd.f32 %v751, %v752
    %v754 = vrot.slane %v753, 1
    %v755 = vadd.f32 %v753, %v754
    %v756 = vmul.f32 %v734, 0.0625
    %v757 = vmul.f32 %v741, 0.0625
    %v758 = vmul.f32 %v748, 0.0625
    %v759 = vmul.f32 %v755, 0.0625
    %v760 = vadd.f32 %v710, %v756
    %v761 = vadd.f32 %v712, %v757
    %v762 = vadd.f32 %v714, %v756
    %v763 = vadd.f32 %v716, %v757
    %v764 = vadd.f32 %v720, %v758
    %v765 = vadd.f32 %v722, %v759
    %v766 = vadd.f32 %v724, %v758
    %v767 = vadd.f32 %v726, %v759
    %v768 = vmax.f32 %v760, 0.0
    %v769 = vmax.f32 %v761, 0.0
    %v770 = vmax.f32 %v762, 0.0
    %v771 = vmax.f32 %v763, 0.0
    %v772 = vmax.f32 %v764, 0.0
    %v773 = vmax.f32 %v765, 0.0
    %v774 = vmax.f32 %v766, 0.0
    %v775 = vmax.f32 %v767, 0.0
    %s776 = scalar_lea.vmem %s2, 256
    %v777 = vld [vmem:[%s776] sm:$0xff]
    %v778 = vld [vmem:[%s776 + $0x8] sm:$0xff]
    %v779 = vld [vmem:[%s776 + $0x10] sm:$0xff]
    %v780 = vld [vmem:[%s776 + $0x18] sm:$0xff]
    %v781 = vld [vmem:[%s776 + $0x20] sm:$0xff]
    %v782 = vld [vmem:[%s776 + $0x28] sm:$0xff]
    %v783 = vld [vmem:[%s776 + $0x30] sm:$0xff]
    %v784 = vld [vmem:[%s776 + $0x38] sm:$0xff]
    %v785 = vld [vmem:[%s776 + $0x40] sm:$0xff]
    %v786 = vld [vmem:[%s776 + $0x48] sm:$0xff]
    %v787 = vld [vmem:[%s776 + $0x50] sm:$0xff]
    %v788 = vld [vmem:[%s776 + $0x58] sm:$0xff]
    %v789 = vld [vmem:[%s776 + $0x60] sm:$0xff]
    %v790 = vld [vmem:[%s776 + $0x68] sm:$0xff]
    %v791 = vld [vmem:[%s776 + $0x70] sm:$0xff]
    %v792 = vld [vmem:[%s776 + $0x78] sm:$0xff]
    %v793 = vld [vmem:[%s776 + $0x80] sm:$0xff]
    %v794 = vld [vmem:[%s776 + $0x88] sm:$0xff]
    %v795 = vld [vmem:[%s776 + $0x90] sm:$0xff]
    %v796 = vld [vmem:[%s776 + $0x98] sm:$0xff]
    %v797 = vld [vmem:[%s776 + $0xa0] sm:$0xff]
    %v798 = vld [vmem:[%s776 + $0xa8] sm:$0xff]
    %v799 = vld [vmem:[%s776 + $0xb0] sm:$0xff]
    %v800 = vld [vmem:[%s776 + $0xb8] sm:$0xff]
    %v801 = vld [vmem:[%s776 + $0xc0] sm:$0xff]
    %v802 = vld [vmem:[%s776 + $0xc8] sm:$0xff]
    %v803 = vld [vmem:[%s776 + $0xd0] sm:$0xff]
    %v804 = vld [vmem:[%s776 + $0xd8] sm:$0xff]
    %v805 = vld [vmem:[%s776 + $0xe0] sm:$0xff]
    %v806 = vld [vmem:[%s776 + $0xe8] sm:$0xff]
    %v807 = vld [vmem:[%s776 + $0xf0] sm:$0xff]
    %v808 = vld [vmem:[%s776 + $0xf8] sm:$0xff]
    %v809 = vpack.c.bf16 %v770, %v768
    %v810 = vpack.c.bf16 %v771, %v769
    %v811 = vpack.c.bf16 %v774, %v772
    %v812 = vpack.c.bf16 %v775, %v773
    %s813 = scalar_lea.vmem %s3, 2
    %v814 = vld [vmem:[%s813] sm:$0x3]
    %v816 = vlaneseq
    %v817 = vshrl.u32 %v816, 7
    %v818 = vsub.s32 0, %v817
    %v819 = vrot.slane %v814, %v818
    %v820 = vlaneseq
    %v821 = vshrl.u32 %v820, 7
    %v822 = vsub.s32 1, %v821
    %v823 = vrot.slane %v814, %v822
    %v858 = vunpack.c.l.b16 %v777
    %v859 = vunpack.c.h.b16 %v777
    %v860 = vunpack.c.l.b16 %v778
    %v861 = vunpack.c.h.b16 %v778
    %v862 = vunpack.c.l.b16 %v779
    %v863 = vunpack.c.h.b16 %v779
    %v864 = vunpack.c.l.b16 %v780
    %v865 = vunpack.c.h.b16 %v780
    %v866 = vunpack.c.l.b16 %v781
    %v867 = vunpack.c.h.b16 %v781
    %v868 = vunpack.c.l.b16 %v782
    %v869 = vunpack.c.h.b16 %v782
    %v870 = vunpack.c.l.b16 %v783
    %v871 = vunpack.c.h.b16 %v783
    %v872 = vunpack.c.l.b16 %v784
    %v873 = vunpack.c.h.b16 %v784
    %v874 = vunpack.c.l.b16 %v785
    %v875 = vunpack.c.h.b16 %v785
    %v876 = vunpack.c.l.b16 %v786
    %v877 = vunpack.c.h.b16 %v786
    %v878 = vunpack.c.l.b16 %v787
    %v879 = vunpack.c.h.b16 %v787
    %v880 = vunpack.c.l.b16 %v788
    %v881 = vunpack.c.h.b16 %v788
    %v882 = vunpack.c.l.b16 %v789
    %v883 = vunpack.c.h.b16 %v789
    %v884 = vunpack.c.l.b16 %v790
    %v885 = vunpack.c.h.b16 %v790
    %v886 = vunpack.c.l.b16 %v791
    %v887 = vunpack.c.h.b16 %v791
    %v888 = vunpack.c.l.b16 %v792
    %v889 = vunpack.c.h.b16 %v792
    %v890 = vunpack.c.l.b16 %v793
    %v891 = vunpack.c.h.b16 %v793
    %v892 = vunpack.c.l.b16 %v794
    %v893 = vunpack.c.h.b16 %v794
    %v894 = vunpack.c.l.b16 %v795
    %v895 = vunpack.c.h.b16 %v795
    %v896 = vunpack.c.l.b16 %v796
    %v897 = vunpack.c.h.b16 %v796
    %v898 = vunpack.c.l.b16 %v797
    %v899 = vunpack.c.h.b16 %v797
    %v900 = vunpack.c.l.b16 %v798
    %v901 = vunpack.c.h.b16 %v798
    %v902 = vunpack.c.l.b16 %v799
    %v903 = vunpack.c.h.b16 %v799
    %v904 = vunpack.c.l.b16 %v800
    %v905 = vunpack.c.h.b16 %v800
    %v906 = vunpack.c.l.b16 %v801
    %v907 = vunpack.c.h.b16 %v801
    %v908 = vunpack.c.l.b16 %v802
    %v909 = vunpack.c.h.b16 %v802
    %v910 = vunpack.c.l.b16 %v803
    %v911 = vunpack.c.h.b16 %v803
    %v912 = vunpack.c.l.b16 %v804
    %v913 = vunpack.c.h.b16 %v804
    %v914 = vunpack.c.l.b16 %v805
    %v915 = vunpack.c.h.b16 %v805
    %v916 = vunpack.c.l.b16 %v806
    %v917 = vunpack.c.h.b16 %v806
    %v918 = vunpack.c.l.b16 %v807
    %v919 = vunpack.c.h.b16 %v807
    %v920 = vunpack.c.l.b16 %v808
    %v921 = vunpack.c.h.b16 %v808
    %v922 = vpack.c.b16 %v860, %v858
    %v923 = vpack.c.b16 %v861, %v859
    %v924 = vpack.c.b16 %v864, %v862
    %v925 = vpack.c.b16 %v865, %v863
    %v926 = vpack.c.b16 %v868, %v866
    %v927 = vpack.c.b16 %v869, %v867
    %v928 = vpack.c.b16 %v872, %v870
    %v929 = vpack.c.b16 %v873, %v871
    %v930 = vpack.c.b16 %v876, %v874
    %v931 = vpack.c.b16 %v877, %v875
    %v932 = vpack.c.b16 %v880, %v878
    %v933 = vpack.c.b16 %v881, %v879
    %v934 = vpack.c.b16 %v884, %v882
    %v935 = vpack.c.b16 %v885, %v883
    %v936 = vpack.c.b16 %v888, %v886
    %v937 = vpack.c.b16 %v889, %v887
    %v938 = vpack.c.b16 %v892, %v890
    %v939 = vpack.c.b16 %v893, %v891
    %v940 = vpack.c.b16 %v896, %v894
    %v941 = vpack.c.b16 %v897, %v895
    %v942 = vpack.c.b16 %v900, %v898
    %v943 = vpack.c.b16 %v901, %v899
    %v944 = vpack.c.b16 %v904, %v902
    %v945 = vpack.c.b16 %v905, %v903
    %v946 = vpack.c.b16 %v908, %v906
    %v947 = vpack.c.b16 %v909, %v907
    %v948 = vpack.c.b16 %v912, %v910
    %v949 = vpack.c.b16 %v913, %v911
    %v950 = vpack.c.b16 %v916, %v914
    %v951 = vpack.c.b16 %v917, %v915
    %v952 = vpack.c.b16 %v920, %v918
    %v953 = vpack.c.b16 %v921, %v919
    %986 = vmatprep.subr.bf16.mxu0 %v923
    %987 = vmatpush1.bf16.msra.mxu0 %v922
    %988 = vmatprep.subr.bf16.mxu0 %v925
    %989 = vmatpush1.bf16.msra.mxu0 %v924
    %990 = vmatprep.subr.bf16.mxu0 %v927
    %991 = vmatpush1.bf16.msra.mxu0 %v926
    %992 = vmatprep.subr.bf16.mxu0 %v929
    %993 = vmatpush1.bf16.msra.mxu0 %v928
    %994 = vmatprep.subr.bf16.mxu0 %v931
    %995 = vmatpush1.bf16.msra.mxu0 %v930
    %996 = vmatprep.subr.bf16.mxu0 %v933
    %997 = vmatpush1.bf16.msra.mxu0 %v932
    %998 = vmatprep.subr.bf16.mxu0 %v935
    %999 = vmatpush1.bf16.msra.mxu0 %v934
    %1000 = vmatprep.subr.bf16.mxu0 %v937
    %1001 = vmatpush1.bf16.msra.mxu0 %v936
    %1002 = vmatprep.subr.bf16.mxu0 %v939
    %1003 = vmatpush1.bf16.msra.mxu0 %v938
    %1004 = vmatprep.subr.bf16.mxu0 %v941
    %1005 = vmatpush1.bf16.msra.mxu0 %v940
    %1006 = vmatprep.subr.bf16.mxu0 %v943
    %1007 = vmatpush1.bf16.msra.mxu0 %v942
    %1008 = vmatprep.subr.bf16.mxu0 %v945
    %1009 = vmatpush1.bf16.msra.mxu0 %v944
    %1010 = vmatprep.subr.bf16.mxu0 %v947
    %1011 = vmatpush1.bf16.msra.mxu0 %v946
    %1012 = vmatprep.subr.bf16.mxu0 %v949
    %1013 = vmatpush1.bf16.msra.mxu0 %v948
    %1014 = vmatprep.subr.bf16.mxu0 %v951
    %1015 = vmatpush1.bf16.msra.mxu0 %v950
    %1016 = vmatprep.subr.bf16.mxu0 %v953
    %1017 = vmatpush1.bf16.msra.mxu0 %v952
    %1018 = vmatprep.mubr.bf16.mxu0 %v810
    %1019 = vmatmul.mubr.bf16.gmra.mrb[0].mxu0 %v809
    %v1020 = vpop.f32.mrb[0].mxu0
    %v1021 = vadd.f32 %v819, %v1020
    %v1022 = vpop.f32.mrb[0].mxu0
    %v1023 = vadd.f32 %v823, %v1022
    %v1024 = vpop.f32.mrb[0].mxu0
    %v1025 = vadd.f32 %v819, %v1024
    %v1026 = vpop.f32.mrb[0].mxu0
    %v1027 = vadd.f32 %v823, %v1026
    %1028 = vmatprep.mubr.bf16.mxu0 %v812
    %1029 = vmatmul.mubr.bf16.gmra.mrb[0].mxu0 %v811
    %v1030 = vpop.f32.mrb[0].mxu0
    %v1031 = vadd.f32 %v819, %v1030
    %v1032 = vpop.f32.mrb[0].mxu0
    %v1033 = vadd.f32 %v823, %v1032
    %v1034 = vpop.f32.mrb[0].mxu0
    %v1035 = vadd.f32 %v819, %v1034
    %v1036 = vpop.f32.mrb[0].mxu0
    %v1037 = vadd.f32 %v823, %v1036
    %1038 = vdwg.mxu0
    %v1039 = vadd.f32 %v1021, %v1025
    %v1040 = vrot.slane %v1039, 4
    %v1041 = vadd.f32 %v1039, %v1040
    %v1042 = vrot.slane %v1041, 2
    %v1043 = vadd.f32 %v1041, %v1042
    %v1044 = vrot.slane %v1043, 1
    %v1045 = vadd.f32 %v1043, %v1044
    %v1046 = vadd.f32 %v1023, %v1027
    %v1047 = vrot.slane %v1046, 4
    %v1048 = vadd.f32 %v1046, %v1047
    %v1049 = vrot.slane %v1048, 2
    %v1050 = vadd.f32 %v1048, %v1049
    %v1051 = vrot.slane %v1050, 1
    %v1052 = vadd.f32 %v1050, %v1051
    %v1053 = vadd.f32 %v1031, %v1035
    %v1054 = vrot.slane %v1053, 4
    %v1055 = vadd.f32 %v1053, %v1054
    %v1056 = vrot.slane %v1055, 2
    %v1057 = vadd.f32 %v1055, %v1056
    %v1058 = vrot.slane %v1057, 1
    %v1059 = vadd.f32 %v1057, %v1058
    %v1060 = vadd.f32 %v1033, %v1037
    %v1061 = vrot.slane %v1060, 4
    %v1062 = vadd.f32 %v1060, %v1061
    %v1063 = vrot.slane %v1062, 2
    %v1064 = vadd.f32 %v1062, %v1063
    %v1065 = vrot.slane %v1064, 1
    %v1066 = vadd.f32 %v1064, %v1065
    %v1067 = vmul.f32 %v1045, 0.0625
    %v1068 = vmul.f32 %v1052, 0.0625
    %v1069 = vmul.f32 %v1059, 0.0625
    %v1070 = vmul.f32 %v1066, 0.0625
    %v1071 = vadd.f32 %v1021, %v1067
    %v1072 = vadd.f32 %v1023, %v1068
    %v1073 = vadd.f32 %v1025, %v1067
    %v1074 = vadd.f32 %v1027, %v1068
    %v1075 = vadd.f32 %v1031, %v1069
    %v1076 = vadd.f32 %v1033, %v1070
    %v1077 = vadd.f32 %v1035, %v1069
    %v1078 = vadd.f32 %v1037, %v1070
    %v1079 = vmax.f32 %v1071, 0.0
    %v1080 = vmax.f32 %v1072, 0.0
    %v1081 = vmax.f32 %v1073, 0.0
    %v1082 = vmax.f32 %v1074, 0.0
    %v1083 = vmax.f32 %v1075, 0.0
    %v1084 = vmax.f32 %v1076, 0.0
    %v1085 = vmax.f32 %v1077, 0.0
    %v1086 = vmax.f32 %v1078, 0.0
    %v1087 = vld [vmem:[%s4] sm:$0xff]
    %v1088 = vld [vmem:[%s4 + $0x8] sm:$0xff]
    %vm1089 = vcmask 261120
    %v1091 = vsel %vm1089, %v1087, 0
    %v1094 = vsel %vm1089, %v1088, 0
    %1096 = vmatprep.subr.mxu0 %v1080
    %1097 = vmatpush1.msra.mxu0 %v1079
    %1098 = vmatprep.subr.mxu0 %v1082
    %1099 = vmatpush1.msra.mxu0 %v1081
    %1100 = vmatprep.subr.mxu0 %v1084
    %1101 = vmatpush1.msra.mxu0 %v1083
    %1102 = vmatprep.subr.mxu0 %v1086
    %1103 = vmatpush1.msra.mxu0 %v1085
    %1104 = vmatprep.subr.mxu0 0.0
    %1105 = vmatpush1.msra.mxu0 0.0
    %1106 = vmatprep.subr.mxu0 0.0
    %1107 = vmatpush1.msra.mxu0 0.0
    %1108 = vmatprep.subr.mxu0 0.0
    %1109 = vmatpush1.msra.mxu0 0.0
    %1110 = vmatprep.subr.mxu0 0.0
    %1111 = vmatpush1.msra.mxu0 0.0
    %1112 = vmatprep.subr.mxu0 0.0
    %1113 = vmatpush1.msra.mxu0 0.0
    %1114 = vmatprep.subr.mxu0 0.0
    %1115 = vmatpush1.msra.mxu0 0.0
    %1116 = vmatprep.subr.mxu0 0.0
    %1117 = vmatpush1.msra.mxu0 0.0
    %1118 = vmatprep.subr.mxu0 0.0
    %1119 = vmatpush1.msra.mxu0 0.0
    %1120 = vmatprep.subr.mxu0 0.0
    %1121 = vmatpush1.msra.mxu0 0.0
    %1122 = vmatprep.subr.mxu0 0.0
    %1123 = vmatpush1.msra.mxu0 0.0
    %1124 = vmatprep.subr.mxu0 0.0
    %1125 = vmatpush1.msra.mxu0 0.0
    %1126 = vmatprep.subr.mxu0 0.0
    %1127 = vmatpush1.msra.mxu0 0.0
    %1128 = vmatprep.subr.mxu0 0.0
    %1129 = vmatpush1.msra.mxu0 0.0
    %1130 = vmatprep.subr.mxu0 0.0
    %1131 = vmatpush1.msra.mxu0 0.0
    %1132 = vmatprep.subr.mxu0 0.0
    %1133 = vmatpush1.msra.mxu0 0.0
    %1134 = vmatprep.subr.mxu0 0.0
    %1135 = vmatpush1.msra.mxu0 0.0
    %1136 = vmatprep.subr.mxu0 0.0
    %1137 = vmatpush1.msra.mxu0 0.0
    %1138 = vmatprep.subr.mxu0 0.0
    %1139 = vmatpush1.msra.mxu0 0.0
    %1140 = vmatprep.subr.mxu0 0.0
    %1141 = vmatpush1.msra.mxu0 0.0
    %1142 = vmatprep.subr.mxu0 0.0
    %1143 = vmatpush1.msra.mxu0 0.0
    %1144 = vmatprep.subr.mxu0 0.0
    %1145 = vmatpush1.msra.mxu0 0.0
    %1146 = vmatprep.subr.mxu0 0.0
    %1147 = vmatpush1.msra.mxu0 0.0
    %1148 = vmatprep.subr.mxu0 0.0
    %1149 = vmatpush1.msra.mxu0 0.0
    %1150 = vmatprep.subr.mxu0 0.0
    %1151 = vmatpush1.msra.mxu0 0.0
    %1152 = vmatprep.subr.mxu0 0.0
    %1153 = vmatpush1.msra.mxu0 0.0
    %1154 = vmatprep.subr.mxu0 0.0
    %1155 = vmatpush1.msra.mxu0 0.0
    %1156 = vmatprep.subr.mxu0 0.0
    %1157 = vmatpush1.msra.mxu0 0.0
    %1158 = vmatprep.subr.mxu0 0.0
    %1159 = vmatpush1.msra.mxu0 0.0
    %1160 = vmatprep.mubr.f32.mxu0 0.0
    %1161 = vmatmul.mubr.f32.gmra.mrb[0].mxu0 %v1091
    %v1162 = vpop.f32.mrb[0].mxu0
    %v1163 = vadd.f32 0.0, %v1162
    %v1164 = vpop.f32.mrb[0].mxu0
    %v1165 = vadd.f32 0.0, %v1164
    %1166 = vmatprep.mubr.f32.mxu0 0.0
    %1167 = vmatmul.mubr.f32.gmra.mrb[0].mxu0 %v1094
    %v1168 = vpop.f32.mrb[0].mxu0
    %v1169 = vadd.f32 0.0, %v1168
    %v1170 = vpop.f32.mrb[0].mxu0
    %v1171 = vadd.f32 0.0, %v1170
    %1172 = vdwg.mxu0
    %v1173 = vpack.c.bf16 %v1163, %v1163
    %v1174 = vpack.c.bf16 %v1165, %v1165
    %v1175 = vld [vmem:[%s5] sm:$0xf]
    %v1176 = vld [vmem:[%s5 + $0x4] sm:$0xf]
    %v1177 = vld [vmem:[%s5 + $0x8] sm:$0xf]
    %v1178 = vld [vmem:[%s5 + $0xc] sm:$0xf]
    %v1179 = vld [vmem:[%s5 + $0x10] sm:$0xf]
    %v1180 = vld [vmem:[%s5 + $0x14] sm:$0xf]
    %v1181 = vld [vmem:[%s5 + $0x18] sm:$0xf]
    %v1182 = vld [vmem:[%s5 + $0x1c] sm:$0xf]
    %v1183 = vld [vmem:[%s5 + $0x20] sm:$0xf]
    %v1184 = vld [vmem:[%s5 + $0x24] sm:$0xf]
    %v1185 = vld [vmem:[%s5 + $0x28] sm:$0xf]
    %v1186 = vld [vmem:[%s5 + $0x2c] sm:$0xf]
    %v1187 = vld [vmem:[%s5 + $0x30] sm:$0xf]
    %v1188 = vld [vmem:[%s5 + $0x34] sm:$0xf]
    %v1189 = vld [vmem:[%s5 + $0x38] sm:$0xf]
    %v1190 = vld [vmem:[%s5 + $0x3c] sm:$0xf]
    %v1191 = vld [vmem:[%s5 + $0x40] sm:$0xf]
    %v1192 = vld [vmem:[%s5 + $0x44] sm:$0xf]
    %v1193 = vld [vmem:[%s5 + $0x48] sm:$0xf]
    %v1194 = vld [vmem:[%s5 + $0x4c] sm:$0xf]
    %v1195 = vld [vmem:[%s5 + $0x50] sm:$0xf]
    %v1196 = vld [vmem:[%s5 + $0x54] sm:$0xf]
    %v1197 = vld [vmem:[%s5 + $0x58] sm:$0xf]
    %v1198 = vld [vmem:[%s5 + $0x5c] sm:$0xf]
    %v1199 = vld [vmem:[%s5 + $0x60] sm:$0xf]
    %v1200 = vld [vmem:[%s5 + $0x64] sm:$0xf]
    %v1201 = vld [vmem:[%s5 + $0x68] sm:$0xf]
    %v1202 = vld [vmem:[%s5 + $0x6c] sm:$0xf]
    %v1203 = vld [vmem:[%s5 + $0x70] sm:$0xf]
    %v1204 = vld [vmem:[%s5 + $0x74] sm:$0xf]
    %v1205 = vld [vmem:[%s5 + $0x78] sm:$0xf]
    %v1206 = vld [vmem:[%s5 + $0x7c] sm:$0xf]
    %v1207 = vpack.c.bf16 %v1169, %v1169
    %v1208 = vpack.c.bf16 %v1171, %v1171
    %v1209 = vld [vmem:[%s5 + $0x80] sm:$0xf]
    %v1210 = vld [vmem:[%s5 + $0x84] sm:$0xf]
    %v1211 = vld [vmem:[%s5 + $0x88] sm:$0xf]
    %v1212 = vld [vmem:[%s5 + $0x8c] sm:$0xf]
    %v1213 = vld [vmem:[%s5 + $0x90] sm:$0xf]
    %v1214 = vld [vmem:[%s5 + $0x94] sm:$0xf]
    %v1215 = vld [vmem:[%s5 + $0x98] sm:$0xf]
    %v1216 = vld [vmem:[%s5 + $0x9c] sm:$0xf]
    %v1217 = vld [vmem:[%s5 + $0xa0] sm:$0xf]
    %v1218 = vld [vmem:[%s5 + $0xa4] sm:$0xf]
    %v1219 = vld [vmem:[%s5 + $0xa8] sm:$0xf]
    %v1220 = vld [vmem:[%s5 + $0xac] sm:$0xf]
    %v1221 = vld [vmem:[%s5 + $0xb0] sm:$0xf]
    %v1222 = vld [vmem:[%s5 + $0xb4] sm:$0xf]
    %v1223 = vld [vmem:[%s5 + $0xb8] sm:$0xf]
    %v1224 = vld [vmem:[%s5 + $0xbc] sm:$0xf]
    %v1225 = vld [vmem:[%s5 + $0xc0] sm:$0xf]
    %v1226 = vld [vmem:[%s5 + $0xc4] sm:$0xf]
    %v1227 = vld [vmem:[%s5 + $0xc8] sm:$0xf]
    %v1228 = vld [vmem:[%s5 + $0xcc] sm:$0xf]
    %v1229 = vld [vmem:[%s5 + $0xd0] sm:$0xf]
    %v1230 = vld [vmem:[%s5 + $0xd4] sm:$0xf]
    %v1231 = vld [vmem:[%s5 + $0xd8] sm:$0xf]
    %v1232 = vld [vmem:[%s5 + $0xdc] sm:$0xf]
    %v1233 = vld [vmem:[%s5 + $0xe0] sm:$0xf]
    %v1234 = vld [vmem:[%s5 + $0xe4] sm:$0xf]
    %v1235 = vld [vmem:[%s5 + $0xe8] sm:$0xf]
    %v1236 = vld [vmem:[%s5 + $0xec] sm:$0xf]
    %v1237 = vld [vmem:[%s5 + $0xf0] sm:$0xf]
    %v1238 = vld [vmem:[%s5 + $0xf4] sm:$0xf]
    %v1239 = vld [vmem:[%s5 + $0xf8] sm:$0xf]
    %v1240 = vld [vmem:[%s5 + $0xfc] sm:$0xf]
    %v1273 = vunpack.c.l.b16 %v1209
    %v1274 = vunpack.c.l.b16 %v1210
    %v1275 = vunpack.c.l.b16 %v1211
    %v1276 = vunpack.c.l.b16 %v1212
    %v1277 = vunpack.c.l.b16 %v1213
    %v1278 = vunpack.c.l.b16 %v1214
    %v1279 = vunpack.c.l.b16 %v1215
    %v1280 = vunpack.c.l.b16 %v1216
    %v1281 = vunpack.c.l.b16 %v1217
    %v1282 = vunpack.c.l.b16 %v1218
    %v1283 = vunpack.c.l.b16 %v1219
    %v1284 = vunpack.c.l.b16 %v1220
    %v1285 = vunpack.c.l.b16 %v1221
    %v1286 = vunpack.c.l.b16 %v1222
    %v1287 = vunpack.c.l.b16 %v1223
    %v1288 = vunpack.c.l.b16 %v1224
    %v1289 = vunpack.c.l.b16 %v1225
    %v1290 = vunpack.c.l.b16 %v1226
    %v1291 = vunpack.c.l.b16 %v1227
    %v1292 = vunpack.c.l.b16 %v1228
    %v1293 = vunpack.c.l.b16 %v1229
    %v1294 = vunpack.c.l.b16 %v1230
    %v1295 = vunpack.c.l.b16 %v1231
    %v1296 = vunpack.c.l.b16 %v1232
    %v1297 = vunpack.c.l.b16 %v1233
    %v1298 = vunpack.c.l.b16 %v1234
    %v1299 = vunpack.c.l.b16 %v1235
    %v1300 = vunpack.c.l.b16 %v1236
    %v1301 = vunpack.c.l.b16 %v1237
    %v1302 = vunpack.c.l.b16 %v1238
    %v1303 = vunpack.c.l.b16 %v1239
    %v1304 = vunpack.c.l.b16 %v1240
    %v1305 = vpack.c.b16 %v1274, %v1273
    %v1306 = vpack.c.b16 %v1276, %v1275
    %v1307 = vpack.c.b16 %v1278, %v1277
    %v1308 = vpack.c.b16 %v1280, %v1279
    %v1309 = vpack.c.b16 %v1282, %v1281
    %v1310 = vpack.c.b16 %v1284, %v1283
    %v1311 = vpack.c.b16 %v1286, %v1285
    %v1312 = vpack.c.b16 %v1288, %v1287
    %v1313 = vpack.c.b16 %v1290, %v1289
    %v1314 = vpack.c.b16 %v1292, %v1291
    %v1315 = vpack.c.b16 %v1294, %v1293
    %v1316 = vpack.c.b16 %v1296, %v1295
    %v1317 = vpack.c.b16 %v1298, %v1297
    %v1318 = vpack.c.b16 %v1300, %v1299
    %v1319 = vpack.c.b16 %v1302, %v1301
    %v1320 = vpack.c.b16 %v1304, %v1303
    %1337 = vmatprep.subr.bf16.mxu0 0
    %1338 = vmatpush1.bf16.msra.mxu0 %v1305
    %1339 = vmatprep.subr.bf16.mxu0 0
    %1340 = vmatpush1.bf16.msra.mxu0 %v1306
    %1341 = vmatprep.subr.bf16.mxu0 0
    %1342 = vmatpush1.bf16.msra.mxu0 %v1307
    %1343 = vmatprep.subr.bf16.mxu0 0
    %1344 = vmatpush1.bf16.msra.mxu0 %v1308
    %1345 = vmatprep.subr.bf16.mxu0 0
    %1346 = vmatpush1.bf16.msra.mxu0 %v1309
    %1347 = vmatprep.subr.bf16.mxu0 0
    %1348 = vmatpush1.bf16.msra.mxu0 %v1310
    %1349 = vmatprep.subr.bf16.mxu0 0
    %1350 = vmatpush1.bf16.msra.mxu0 %v1311
    %1351 = vmatprep.subr.bf16.mxu0 0
    %1352 = vmatpush1.bf16.msra.mxu0 %v1312
    %1353 = vmatprep.subr.bf16.mxu0 0
    %1354 = vmatpush1.bf16.msra.mxu0 %v1313
    %1355 = vmatprep.subr.bf16.mxu0 0
    %1356 = vmatpush1.bf16.msra.mxu0 %v1314
    %1357 = vmatprep.subr.bf16.mxu0 0
    %1358 = vmatpush1.bf16.msra.mxu0 %v1315
    %1359 = vmatprep.subr.bf16.mxu0 0
    %1360 = vmatpush1.bf16.msra.mxu0 %v1316
    %1361 = vmatprep.subr.bf16.mxu0 0
    %1362 = vmatpush1.bf16.msra.mxu0 %v1317
    %1363 = vmatprep.subr.bf16.mxu0 0
    %1364 = vmatpush1.bf16.msra.mxu0 %v1318
    %1365 = vmatprep.subr.bf16.mxu0 0
    %1366 = vmatpush1.bf16.msra.mxu0 %v1319
    %1367 = vmatprep.subr.bf16.mxu0 0
    %1368 = vmatpush1.bf16.msra.mxu0 %v1320
    %1369 = vmatprep.mubr.bf16.mxu0 %v1208
    %1370 = vmatmul.mubr.bf16.gmra.mrb[0].mxu0 %v1207
    %v1371 = vpop.f32.mrb[0].mxu0
    %v1372 = vadd.f32 0.0, %v1371
    %v1373 = vpop.f32.mrb[0].mxu0
    %v1374 = vpop.f32.mrb[0].mxu0
    %v1375 = vpop.f32.mrb[0].mxu0
    %1376 = vdwg.mxu0
    %v1409 = vunpack.c.l.b16 %v1175
    %v1410 = vunpack.c.l.b16 %v1176
    %v1411 = vunpack.c.l.b16 %v1177
    %v1412 = vunpack.c.l.b16 %v1178
    %v1413 = vunpack.c.l.b16 %v1179
    %v1414 = vunpack.c.l.b16 %v1180
    %v1415 = vunpack.c.l.b16 %v1181
    %v1416 = vunpack.c.l.b16 %v1182
    %v1417 = vunpack.c.l.b16 %v1183
    %v1418 = vunpack.c.l.b16 %v1184
    %v1419 = vunpack.c.l.b16 %v1185
    %v1420 = vunpack.c.l.b16 %v1186
    %v1421 = vunpack.c.l.b16 %v1187
    %v1422 = vunpack.c.l.b16 %v1188
    %v1423 = vunpack.c.l.b16 %v1189
    %v1424 = vunpack.c.l.b16 %v1190
    %v1425 = vunpack.c.l.b16 %v1191
    %v1426 = vunpack.c.l.b16 %v1192
    %v1427 = vunpack.c.l.b16 %v1193
    %v1428 = vunpack.c.l.b16 %v1194
    %v1429 = vunpack.c.l.b16 %v1195
    %v1430 = vunpack.c.l.b16 %v1196
    %v1431 = vunpack.c.l.b16 %v1197
    %v1432 = vunpack.c.l.b16 %v1198
    %v1433 = vunpack.c.l.b16 %v1199
    %v1434 = vunpack.c.l.b16 %v1200
    %v1435 = vunpack.c.l.b16 %v1201
    %v1436 = vunpack.c.l.b16 %v1202
    %v1437 = vunpack.c.l.b16 %v1203
    %v1438 = vunpack.c.l.b16 %v1204
    %v1439 = vunpack.c.l.b16 %v1205
    %v1440 = vunpack.c.l.b16 %v1206
    %v1441 = vpack.c.b16 %v1410, %v1409
    %v1442 = vpack.c.b16 %v1412, %v1411
    %v1443 = vpack.c.b16 %v1414, %v1413
    %v1444 = vpack.c.b16 %v1416, %v1415
    %v1445 = vpack.c.b16 %v1418, %v1417
    %v1446 = vpack.c.b16 %v1420, %v1419
    %v1447 = vpack.c.b16 %v1422, %v1421
    %v1448 = vpack.c.b16 %v1424, %v1423
    %v1449 = vpack.c.b16 %v1426, %v1425
    %v1450 = vpack.c.b16 %v1428, %v1427
    %v1451 = vpack.c.b16 %v1430, %v1429
    %v1452 = vpack.c.b16 %v1432, %v1431
    %v1453 = vpack.c.b16 %v1434, %v1433
    %v1454 = vpack.c.b16 %v1436, %v1435
    %v1455 = vpack.c.b16 %v1438, %v1437
    %v1456 = vpack.c.b16 %v1440, %v1439
    %1473 = vmatprep.subr.bf16.mxu0 0
    %1474 = vmatpush1.bf16.msra.mxu0 %v1441
    %1475 = vmatprep.subr.bf16.mxu0 0
    %1476 = vmatpush1.bf16.msra.mxu0 %v1442
    %1477 = vmatprep.subr.bf16.mxu0 0
    %1478 = vmatpush1.bf16.msra.mxu0 %v1443
    %1479 = vmatprep.subr.bf16.mxu0 0
    %1480 = vmatpush1.bf16.msra.mxu0 %v1444
    %1481 = vmatprep.subr.bf16.mxu0 0
    %1482 = vmatpush1.bf16.msra.mxu0 %v1445
    %1483 = vmatprep.subr.bf16.mxu0 0
    %1484 = vmatpush1.bf16.msra.mxu0 %v1446
    %1485 = vmatprep.subr.bf16.mxu0 0
    %1486 = vmatpush1.bf16.msra.mxu0 %v1447
    %1487 = vmatprep.subr.bf16.mxu0 0
    %1488 = vmatpush1.bf16.msra.mxu0 %v1448
    %1489 = vmatprep.subr.bf16.mxu0 0
    %1490 = vmatpush1.bf16.msra.mxu0 %v1449
    %1491 = vmatprep.subr.bf16.mxu0 0
    %1492 = vmatpush1.bf16.msra.mxu0 %v1450
    %1493 = vmatprep.subr.bf16.mxu0 0
    %1494 = vmatpush1.bf16.msra.mxu0 %v1451
    %1495 = vmatprep.subr.bf16.mxu0 0
    %1496 = vmatpush1.bf16.msra.mxu0 %v1452
    %1497 = vmatprep.subr.bf16.mxu0 0
    %1498 = vmatpush1.bf16.msra.mxu0 %v1453
    %1499 = vmatprep.subr.bf16.mxu0 0
    %1500 = vmatpush1.bf16.msra.mxu0 %v1454
    %1501 = vmatprep.subr.bf16.mxu0 0
    %1502 = vmatpush1.bf16.msra.mxu0 %v1455
    %1503 = vmatprep.subr.bf16.mxu0 0
    %1504 = vmatpush1.bf16.msra.mxu0 %v1456
    %1505 = vmatprep.mubr.bf16.mxu0 %v1174
    %1506 = vmatmul.mubr.bf16.gmra.mrb[0].mxu0 %v1173
    %v1507 = vpop.f32.mrb[0].mxu0
    %v1508 = vadd.f32 %v1372, %v1507
    %v1509 = vpop.f32.mrb[0].mxu0
    %v1510 = vpop.f32.mrb[0].mxu0
    %v1511 = vpop.f32.mrb[0].mxu0
    %1512 = vdwg.mxu0
    %v1513 = vld [vmem:[%s6] sm:$0x1]
    %v1515 = vlaneseq
    %v1516 = vshrl.u32 %v1515, 7
    %v1517 = vsub.s32 0, %v1516
    %v1518 = vrot.slane %v1513, %v1517
    %v1520 = vadd.f32 %v1508, %v1518
    %1521 = vst [vmem:[%s7] sm:$0xff] %v1520
    // Predicated region
    $region34: #{forward.1} parent=1 // pred_check
      _
    $region35: #{forward.1} parent=1 // pred_check_branch
      %1523 = sbr.rel (0) target = $region37
    $region36: #{forward.1} parent=1 // pred_region
      _
    $region37: #{forward.1} parent=1 // pred_fallthru
      _
    // Predicated region
    $region38: #{forward.1} parent=1 // pred_check
      _
    $region39: #{forward.1} parent=1 // pred_check_branch
      %1525 = sbr.rel (0) target = $region41
    $region40: #{forward.1} parent=1 // pred_region
      _
    $region41: #{forward.1} parent=1 // pred_fallthru
      _
    %1526 = vsyncpa [#allocation4], 1

</llo_original>
